<compile_context>
chip_gen: v7x
topology: tpu7x:2x2x1
jax: 0.10.0
libtpu: 0.0.40
codegen_flags: <defaults>
</compile_context>

<pallas_src>
import math

import jax
import jax.numpy as jnp
from jax.experimental import pallas as pl
from jax.experimental.pallas import tpu as pltpu


# ------------------------------ Fused kernel --------------------------------

def _make_decoder_kernel(n_layers, n_dirs=2):
    """Builds the fully-fused decoder forward kernel."""

    def kernel(*refs):
        tok_ref = refs[0]                       # (B, 1) int32, VMEM
        emb_ref = refs[1]                       # (V, E) bf16
        hid_ref = refs[2]                       # (n_layers*n_dirs, B, H) f32
        gru_refs = refs[3:3 + 4 * n_layers]     # per layer: w_ih, w_hh, b_ih, b_hh
        fcw_ref = refs[3 + 4 * n_layers]        # (n_dirs*H, V) bf16
        fcb_ref = refs[4 + 4 * n_layers]        # (1, V) f32
        out_ref = refs[5 + 4 * n_layers]        # (B, V) f32
        hid_out_ref = refs[6 + 4 * n_layers]    # (B, n_layers*n_dirs*H) f32

        B = hid_ref.shape[1]
        V = emb_ref.shape[0]

        # ---- embedding lookup: vectorized one-hot matmul ----
        iota_v = jax.lax.broadcasted_iota(jnp.int32, (B, V), 1)
        onehot = (iota_v == tok_ref[...]).astype(emb_ref.dtype)      # (B, V)
        x = jnp.dot(onehot, emb_ref[...],
                    preferred_element_type=jnp.float32)              # (B, E) f32
        # TODO(synk): nn.Dropout(p=0.5) on the embedded input and between GRU
        # layers is identity under eval/inference semantics.

        new_h = []
        for layer in range(n_layers):
            wih, whh, bih, bhh = gru_refs[4 * layer: 4 * layer + 4]
            x_mx = x.astype(jnp.bfloat16)       # shared across both directions
            outs = []
            for d in range(n_dirs):
                h_prev = hid_ref[n_dirs * layer + d]                  # (B, H) f32
                h_mx = h_prev.astype(jnp.bfloat16)

                def gi(g, x_mx=x_mx, wih=wih, bih=bih, d=d):
                    k = d * 3 + g
                    return (jnp.dot(x_mx, wih[k],
                                    preferred_element_type=jnp.float32)
                            + bih[k])

                def gh(g, h_mx=h_mx, whh=whh, bhh=bhh, d=d):
                    k = d * 3 + g
                    return (jnp.dot(h_mx, whh[k],
                                    preferred_element_type=jnp.float32)
                            + bhh[k])

                # PyTorch gate order: r, z, n  (f32 elementwise math)
                r = jax.nn.sigmoid(gi(0) + gh(0))
                z = jax.nn.sigmoid(gi(1) + gh(1))
                n = jnp.tanh(gi(2) + r * gh(2))
                h_new = (1.0 - z) * n + z * h_prev
                outs.append(h_new)
                new_h.append(h_new)
            x = jnp.concatenate(outs, axis=-1)                        # (B, 2H)

        # ---- fc_out + LogSoftmax(dim=1), fused ----
        logits = jnp.dot(x.astype(jnp.bfloat16), fcw_ref[...],
                         preferred_element_type=jnp.float32) + fcb_ref[...]
        m = jnp.max(logits, axis=-1, keepdims=True)
        shifted = logits - m
        lse = jnp.log(jnp.sum(jnp.exp(shifted), axis=-1, keepdims=True))
        out_ref[...] = (shifted - lse).astype(out_ref.dtype)

        # ---- lane-dense hidden writeback: single (B, n_layers*n_dirs*H) slab
        hid_out_ref[...] = jnp.concatenate(new_h, axis=-1).astype(hid_out_ref.dtype)

    return kernel


# --------------------------- Parameter creation -----------------------------

def init_decoder_params(key, output_dim, emb_dim, hid_dim, n_layers):
    n_dirs = 2
    keys = jax.random.split(key, 3 + n_layers)

    params = {}
    # nn.Embedding default init: N(0, 1); stored bf16 for MXU.
    params["embedding"] = jax.random.normal(
        keys[0], (output_dim, emb_dim), jnp.float32).astype(jnp.bfloat16)

    # GRU weights: uniform(-1/sqrt(H), 1/sqrt(H)), per-gate slabs, bf16.
    kscale = 1.0 / math.sqrt(hid_dim)
    gru = []
    for layer in range(n_layers):
        in_size = emb_dim if layer == 0 else n_dirs * hid_dim
        lk = iter(jax.random.split(keys[3 + layer], n_dirs * 3 * 4))
        wih, whh, bih, bhh = [], [], [], []
        for _d in range(n_dirs):
            for _g in range(3):          # gate order r, z, n
                wih.append(jax.random.uniform(next(lk), (in_size, hid_dim),
                                              jnp.float32, -kscale, kscale))
                whh.append(jax.random.uniform(next(lk), (hid_dim, hid_dim),
                                              jnp.float32, -kscale, kscale))
                bih.append(jax.random.uniform(next(lk), (1, hid_dim),
                                              jnp.float32, -kscale, kscale))
                bhh.append(jax.random.uniform(next(lk), (1, hid_dim),
                                              jnp.float32, -kscale, kscale))
        gru.append(dict(
            w_ih=jnp.stack(wih).astype(jnp.bfloat16),   # (6, in, H)
            w_hh=jnp.stack(whh).astype(jnp.bfloat16),   # (6, H, H)
            b_ih=jnp.stack(bih),                        # (6, 1, H) f32
            b_hh=jnp.stack(bhh)))                       # (6, 1, H) f32
    params["gru"] = gru

    # fc_out: Linear(2*hid, output_dim), stored transposed (in, out).
    kf = 1.0 / math.sqrt(n_dirs * hid_dim)
    params["fc_w_t"] = jax.random.uniform(
        keys[1], (n_dirs * hid_dim, output_dim), jnp.float32, -kf, kf
    ).astype(jnp.bfloat16)
    params["fc_b"] = jax.random.uniform(keys[2], (1, output_dim),
                                        jnp.float32, -kf, kf)
    return params


# ------------------------------ Forward pass --------------------------------

def decoder_forward(params, token_inputs, hidden):
    """Matches Decoder.forward: (log_probs (B, V), new_hidden (n_layers*2, B, H))."""
    n_layers = len(params["gru"])
    n_dirs = 2
    B = token_inputs.shape[0]
    H = hidden.shape[-1]
    V = params["embedding"].shape[0]

    vmem = pltpu.MemorySpace.VMEM

    flat_gru = []
    for layer in range(n_layers):
        p = params["gru"][layer]
        flat_gru += [p["w_ih"], p["w_hh"], p["b_ih"], p["b_hh"]]

    tok2d = token_inputs.astype(jnp.int32).reshape(B, 1)

    n_in = 3 + len(flat_gru) + 2
    in_specs = [pl.BlockSpec(memory_space=vmem)] * n_in

    log_probs, hid_slab = pl.pallas_call(
        _make_decoder_kernel(n_layers, n_dirs),
        out_shape=(
            jax.ShapeDtypeStruct((B, V), jnp.float32),
            jax.ShapeDtypeStruct((B, n_layers * n_dirs * H), jnp.float32),
        ),
        in_specs=in_specs,
        out_specs=(pl.BlockSpec(memory_space=vmem),
                   pl.BlockSpec(memory_space=vmem)),
    )(tok2d, params["embedding"], hidden,
      *flat_gru, params["fc_w_t"], params["fc_b"])

    # lane-dense slab -> PyTorch hidden layout (n_layers*2, B, H)
    new_hidden = hid_slab.reshape(B, n_layers * n_dirs, H).transpose(1, 0, 2)
    return log_probs, new_hidden


# --------------------------- Pure-JAX reference ------------------------------

def decoder_forward_ref(params, token_inputs, hidden):
    n_layers = len(params["gru"])
    n_dirs = 2
    x = params["embedding"][token_inputs].astype(jnp.float32)
    new_h = []
    for layer in range(n_layers):
        p = params["gru"][layer]
        xb = x.astype(jnp.bfloat16)
        outs = []
        for d in range(n_dirs):
            h_prev = hidden[n_dirs * layer + d]
            hb = h_prev.astype(jnp.bfloat16)

            def gi(g, xb=xb, p=p, d=d):
                k = d * 3 + g
                return jnp.dot(xb, p["w_ih"][k],
                               preferred_element_type=jnp.float32) + p["b_ih"][k]

            def gh(g, hb=hb, p=p, d=d):
                k = d * 3 + g
                return jnp.dot(hb, p["w_hh"][k],
                               preferred_element_type=jnp.float32) + p["b_hh"][k]

            r = jax.nn.sigmoid(gi(0) + gh(0))
            z = jax.nn.sigmoid(gi(1) + gh(1))
            n = jnp.tanh(gi(2) + r * gh(2))
            h_new = (1.0 - z) * n + z * h_prev
            outs.append(h_new)
            new_h.append(h_new)
        x = jnp.concatenate(outs, axis=-1)
    logits = jnp.dot(x.astype(jnp.bfloat16), params["fc_w_t"],
                     preferred_element_type=jnp.float32) + params["fc_b"]
    return jax.nn.log_softmax(logits, axis=-1), jnp.stack(new_h, axis=0)


# ---------------------------------- Main -------------------------------------

if __name__ == "__main__":
    OUTPUT_DIM = 128   # vocab size (lane-dense logits)
    EMB_DIM = 32
    HID_DIM = 32
    N_LAYERS = 2
    BATCH = 2

    root = jax.random.PRNGKey(0)
    k_params, k_tok, k_hid = jax.random.split(root, 3)

    params = init_decoder_params(k_params, OUTPUT_DIM, EMB_DIM, HID_DIM, N_LAYERS)
    token_inputs = jax.random.randint(k_tok, (BATCH,), 0, OUTPUT_DIM, dtype=jnp.int32)
    hidden = jax.random.normal(k_hid, (N_LAYERS * 2, BATCH, HID_DIM), jnp.float32)

    fwd = jax.jit(decoder_forward)
    log_probs, new_hidden = fwd(params, token_inputs, hidden)
    jax.block_until_ready((log_probs, new_hidden))

    assert log_probs.shape == (BATCH, OUTPUT_DIM)
    assert new_hidden.shape == (N_LAYERS * 2, BATCH, HID_DIM)

    # Sanity: log-softmax rows normalize to 1.
    assert bool(jnp.all(jnp.abs(jnp.exp(log_probs).sum(-1) - 1.0) < 1e-3))

    # Cross-check against a pure-JAX reference of the same math.
    ref_lp, ref_h = decoder_forward_ref(params, token_inputs, hidden)
    assert bool(jnp.allclose(log_probs, ref_lp, atol=2e-2, rtol=2e-2))
    assert bool(jnp.allclose(new_hidden, ref_h, atol=2e-2, rtol=2e-2))

    print("KERNEL_OK")
</pallas_src>

<mosaic_0001>
module attributes {stable_mosaic.version = 11 : i64} {
  func.func @kernel(%arg0: memref<2x1xi32, #tpu.memory_space<vmem>>, %arg1: memref<128x32xbf16, #tpu.memory_space<vmem>>, %arg2: memref<4x2x32xf32, #tpu.memory_space<vmem>>, %arg3: memref<6x32x32xbf16, #tpu.memory_space<vmem>>, %arg4: memref<6x32x32xbf16, #tpu.memory_space<vmem>>, %arg5: memref<6x1x32xf32, #tpu.memory_space<vmem>>, %arg6: memref<6x1x32xf32, #tpu.memory_space<vmem>>, %arg7: memref<6x64x32xbf16, #tpu.memory_space<vmem>>, %arg8: memref<6x32x32xbf16, #tpu.memory_space<vmem>>, %arg9: memref<6x1x32xf32, #tpu.memory_space<vmem>>, %arg10: memref<6x1x32xf32, #tpu.memory_space<vmem>>, %arg11: memref<64x128xbf16, #tpu.memory_space<vmem>>, %arg12: memref<1x128xf32, #tpu.memory_space<vmem>>, %arg13: memref<2x128xf32, #tpu.memory_space<vmem>>, %arg14: memref<2x128xf32, #tpu.memory_space<vmem>>) attributes {dimension_semantics = [], scalar_prefetch = 0 : i64, scratch_operands = 0 : i64, tpu.core_type = #tpu.core_type<tc>} {
    %0 = tpu.iota {dimensions = array<i32: 1>} : vector<2x128xi32>
    %c0 = arith.constant 0 : index
    %c0_0 = arith.constant 0 : index
    %1 = vector.load %arg0[%c0, %c0_0] : memref<2x1xi32, #tpu.memory_space<vmem>>, vector<2x1xi32>
    %2 = vector.broadcast %1 : vector<2x1xi32> to vector<2x128xi32>
    %3 = arith.cmpi eq, %0, %2 : vector<2x128xi32>
    %4 = arith.extui %3 : vector<2x128xi1> to vector<2x128xi32>
    %5 = arith.sitofp %4 : vector<2x128xi32> to vector<2x128xf32>
    %6 = arith.truncf %5 : vector<2x128xf32> to vector<2x128xbf16>
    %c0_1 = arith.constant 0 : index
    %c0_2 = arith.constant 0 : index
    %7 = vector.load %arg1[%c0_1, %c0_2] : memref<128x32xbf16, #tpu.memory_space<vmem>>, vector<128x32xbf16>
    %cst = arith.constant dense<0.000000e+00> : vector<2x32xf32>
    %8 = tpu.matmul %6, %7, %cst {dimension_numbers = #tpu.dot_dimension_numbers<[1], [0], [0], [1], [0, 0, 1, 1], [], []>} : vector<2x128xbf16>, vector<128x32xbf16>, vector<2x32xf32> -> vector<2x32xf32>
    %9 = arith.truncf %8 : vector<2x32xf32> to vector<2x32xbf16>
    %c0_3 = arith.constant 0 : index
    %c0_4 = arith.constant 0 : index
    %c0_5 = arith.constant 0 : index
    %10 = vector.load %arg2[%c0_3, %c0_4, %c0_5] : memref<4x2x32xf32, #tpu.memory_space<vmem>>, vector<1x2x32xf32>
    %11 = vector.shape_cast %10 : vector<1x2x32xf32> to vector<2x32xf32>
    %12 = arith.truncf %11 : vector<2x32xf32> to vector<2x32xbf16>
    %c0_6 = arith.constant 0 : index
    %c0_7 = arith.constant 0 : index
    %c0_8 = arith.constant 0 : index
    %13 = vector.load %arg3[%c0_6, %c0_7, %c0_8] : memref<6x32x32xbf16, #tpu.memory_space<vmem>>, vector<1x32x32xbf16>
    %14 = vector.shape_cast %13 : vector<1x32x32xbf16> to vector<32x32xbf16>
    %cst_9 = arith.constant dense<0.000000e+00> : vector<2x32xf32>
    %15 = tpu.matmul %9, %14, %cst_9 {dimension_numbers = #tpu.dot_dimension_numbers<[1], [0], [0], [1], [0, 0, 1, 1], [], []>} : vector<2x32xbf16>, vector<32x32xbf16>, vector<2x32xf32> -> vector<2x32xf32>
    %c0_10 = arith.constant 0 : index
    %c0_11 = arith.constant 0 : index
    %c0_12 = arith.constant 0 : index
    %16 = vector.load %arg5[%c0_10, %c0_11, %c0_12] : memref<6x1x32xf32, #tpu.memory_space<vmem>>, vector<1x1x32xf32>
    %17 = vector.shape_cast %16 : vector<1x1x32xf32> to vector<1x32xf32>
    %18 = vector.broadcast %17 : vector<1x32xf32> to vector<2x32xf32>
    %19 = arith.addf %15, %18 : vector<2x32xf32>
    %c0_13 = arith.constant 0 : index
    %c0_14 = arith.constant 0 : index
    %c0_15 = arith.constant 0 : index
    %20 = vector.load %arg4[%c0_13, %c0_14, %c0_15] : memref<6x32x32xbf16, #tpu.memory_space<vmem>>, vector<1x32x32xbf16>
    %21 = vector.shape_cast %20 : vector<1x32x32xbf16> to vector<32x32xbf16>
    %cst_16 = arith.constant dense<0.000000e+00> : vector<2x32xf32>
    %22 = tpu.matmul %12, %21, %cst_16 {dimension_numbers = #tpu.dot_dimension_numbers<[1], [0], [0], [1], [0, 0, 1, 1], [], []>} : vector<2x32xbf16>, vector<32x32xbf16>, vector<2x32xf32> -> vector<2x32xf32>
    %c0_17 = arith.constant 0 : index
    %c0_18 = arith.constant 0 : index
    %c0_19 = arith.constant 0 : index
    %23 = vector.load %arg6[%c0_17, %c0_18, %c0_19] : memref<6x1x32xf32, #tpu.memory_space<vmem>>, vector<1x1x32xf32>
    %24 = vector.shape_cast %23 : vector<1x1x32xf32> to vector<1x32xf32>
    %25 = vector.broadcast %24 : vector<1x32xf32> to vector<2x32xf32>
    %26 = arith.addf %22, %25 : vector<2x32xf32>
    %27 = arith.addf %19, %26 : vector<2x32xf32>
    %28 = arith.negf %27 : vector<2x32xf32>
    %29 = math.exp %28 : vector<2x32xf32>
    %cst_20 = arith.constant 1.000000e+00 : f32
    %30 = vector.broadcast %cst_20 : f32 to vector<2x32xf32>
    %31 = arith.addf %30, %29 : vector<2x32xf32>
    %32 = arith.divf %30, %31 : vector<2x32xf32>
    %c1 = arith.constant 1 : index
    %c0_21 = arith.constant 0 : index
    %c0_22 = arith.constant 0 : index
    %33 = vector.load %arg3[%c1, %c0_21, %c0_22] : memref<6x32x32xbf16, #tpu.memory_space<vmem>>, vector<1x32x32xbf16>
    %34 = vector.shape_cast %33 : vector<1x32x32xbf16> to vector<32x32xbf16>
    %cst_23 = arith.constant dense<0.000000e+00> : vector<2x32xf32>
    %35 = tpu.matmul %9, %34, %cst_23 {dimension_numbers = #tpu.dot_dimension_numbers<[1], [0], [0], [1], [0, 0, 1, 1], [], []>} : vector<2x32xbf16>, vector<32x32xbf16>, vector<2x32xf32> -> vector<2x32xf32>
    %c1_24 = arith.constant 1 : index
    %c0_25 = arith.constant 0 : index
    %c0_26 = arith.constant 0 : index
    %36 = vector.load %arg5[%c1_24, %c0_25, %c0_26] : memref<6x1x32xf32, #tpu.memory_space<vmem>>, vector<1x1x32xf32>
    %37 = vector.shape_cast %36 : vector<1x1x32xf32> to vector<1x32xf32>
    %38 = vector.broadcast %37 : vector<1x32xf32> to vector<2x32xf32>
    %39 = arith.addf %35, %38 : vector<2x32xf32>
    %c1_27 = arith.constant 1 : index
    %c0_28 = arith.constant 0 : index
    %c0_29 = arith.constant 0 : index
    %40 = vector.load %arg4[%c1_27, %c0_28, %c0_29] : memref<6x32x32xbf16, #tpu.memory_space<vmem>>, vector<1x32x32xbf16>
    %41 = vector.shape_cast %40 : vector<1x32x32xbf16> to vector<32x32xbf16>
    %cst_30 = arith.constant dense<0.000000e+00> : vector<2x32xf32>
    %42 = tpu.matmul %12, %41, %cst_30 {dimension_numbers = #tpu.dot_dimension_numbers<[1], [0], [0], [1], [0, 0, 1, 1], [], []>} : vector<2x32xbf16>, vector<32x32xbf16>, vector<2x32xf32> -> vector<2x32xf32>
    %c1_31 = arith.constant 1 : index
    %c0_32 = arith.constant 0 : index
    %c0_33 = arith.constant 0 : index
    %43 = vector.load %arg6[%c1_31, %c0_32, %c0_33] : memref<6x1x32xf32, #tpu.memory_space<vmem>>, vector<1x1x32xf32>
    %44 = vector.shape_cast %43 : vector<1x1x32xf32> to vector<1x32xf32>
    %45 = vector.broadcast %44 : vector<1x32xf32> to vector<2x32xf32>
    %46 = arith.addf %42, %45 : vector<2x32xf32>
    %47 = arith.addf %39, %46 : vector<2x32xf32>
    %48 = arith.negf %47 : vector<2x32xf32>
    %49 = math.exp %48 : vector<2x32xf32>
    %cst_34 = arith.constant 1.000000e+00 : f32
    %50 = vector.broadcast %cst_34 : f32 to vector<2x32xf32>
    %51 = arith.addf %50, %49 : vector<2x32xf32>
    %52 = arith.divf %50, %51 : vector<2x32xf32>
    %c2 = arith.constant 2 : index
    %c0_35 = arith.constant 0 : index
    %c0_36 = arith.constant 0 : index
    %53 = vector.load %arg3[%c2, %c0_35, %c0_36] : memref<6x32x32xbf16, #tpu.memory_space<vmem>>, vector<1x32x32xbf16>
    %54 = vector.shape_cast %53 : vector<1x32x32xbf16> to vector<32x32xbf16>
    %cst_37 = arith.constant dense<0.000000e+00> : vector<2x32xf32>
    %55 = tpu.matmul %9, %54, %cst_37 {dimension_numbers = #tpu.dot_dimension_numbers<[1], [0], [0], [1], [0, 0, 1, 1], [], []>} : vector<2x32xbf16>, vector<32x32xbf16>, vector<2x32xf32> -> vector<2x32xf32>
    %c2_38 = arith.constant 2 : index
    %c0_39 = arith.constant 0 : index
    %c0_40 = arith.constant 0 : index
    %56 = vector.load %arg5[%c2_38, %c0_39, %c0_40] : memref<6x1x32xf32, #tpu.memory_space<vmem>>, vector<1x1x32xf32>
    %57 = vector.shape_cast %56 : vector<1x1x32xf32> to vector<1x32xf32>
    %58 = vector.broadcast %57 : vector<1x32xf32> to vector<2x32xf32>
    %59 = arith.addf %55, %58 : vector<2x32xf32>
    %c2_41 = arith.constant 2 : index
    %c0_42 = arith.constant 0 : index
    %c0_43 = arith.constant 0 : index
    %60 = vector.load %arg4[%c2_41, %c0_42, %c0_43] : memref<6x32x32xbf16, #tpu.memory_space<vmem>>, vector<1x32x32xbf16>
    %61 = vector.shape_cast %60 : vector<1x32x32xbf16> to vector<32x32xbf16>
    %cst_44 = arith.constant dense<0.000000e+00> : vector<2x32xf32>
    %62 = tpu.matmul %12, %61, %cst_44 {dimension_numbers = #tpu.dot_dimension_numbers<[1], [0], [0], [1], [0, 0, 1, 1], [], []>} : vector<2x32xbf16>, vector<32x32xbf16>, vector<2x32xf32> -> vector<2x32xf32>
    %c2_45 = arith.constant 2 : index
    %c0_46 = arith.constant 0 : index
    %c0_47 = arith.constant 0 : index
    %63 = vector.load %arg6[%c2_45, %c0_46, %c0_47] : memref<6x1x32xf32, #tpu.memory_space<vmem>>, vector<1x1x32xf32>
    %64 = vector.shape_cast %63 : vector<1x1x32xf32> to vector<1x32xf32>
    %65 = vector.broadcast %64 : vector<1x32xf32> to vector<2x32xf32>
    %66 = arith.addf %62, %65 : vector<2x32xf32>
    %67 = arith.mulf %32, %66 : vector<2x32xf32>
    %68 = arith.addf %59, %67 : vector<2x32xf32>
    %69 = math.tanh %68 : vector<2x32xf32>
    %cst_48 = arith.constant 1.000000e+00 : f32
    %70 = vector.broadcast %cst_48 : f32 to vector<2x32xf32>
    %71 = arith.subf %70, %52 : vector<2x32xf32>
    %72 = arith.mulf %71, %69 : vector<2x32xf32>
    %73 = arith.mulf %52, %11 : vector<2x32xf32>
    %74 = arith.addf %72, %73 : vector<2x32xf32>
    %c1_49 = arith.constant 1 : index
    %c0_50 = arith.constant 0 : index
    %c0_51 = arith.constant 0 : index
    %75 = vector.load %arg2[%c1_49, %c0_50, %c0_51] : memref<4x2x32xf32, #tpu.memory_space<vmem>>, vector<1x2x32xf32>
    %76 = vector.shape_cast %75 : vector<1x2x32xf32> to vector<2x32xf32>
    %77 = arith.truncf %76 : vector<2x32xf32> to vector<2x32xbf16>
    %c3 = arith.constant 3 : index
    %c0_52 = arith.constant 0 : index
    %c0_53 = arith.constant 0 : index
    %78 = vector.load %arg3[%c3, %c0_52, %c0_53] : memref<6x32x32xbf16, #tpu.memory_space<vmem>>, vector<1x32x32xbf16>
    %79 = vector.shape_cast %78 : vector<1x32x32xbf16> to vector<32x32xbf16>
    %cst_54 = arith.constant dense<0.000000e+00> : vector<2x32xf32>
    %80 = tpu.matmul %9, %79, %cst_54 {dimension_numbers = #tpu.dot_dimension_numbers<[1], [0], [0], [1], [0, 0, 1, 1], [], []>} : vector<2x32xbf16>, vector<32x32xbf16>, vector<2x32xf32> -> vector<2x32xf32>
    %c3_55 = arith.constant 3 : index
    %c0_56 = arith.constant 0 : index
    %c0_57 = arith.constant 0 : index
    %81 = vector.load %arg5[%c3_55, %c0_56, %c0_57] : memref<6x1x32xf32, #tpu.memory_space<vmem>>, vector<1x1x32xf32>
    %82 = vector.shape_cast %81 : vector<1x1x32xf32> to vector<1x32xf32>
    %83 = vector.broadcast %82 : vector<1x32xf32> to vector<2x32xf32>
    %84 = arith.addf %80, %83 : vector<2x32xf32>
    %c3_58 = arith.constant 3 : index
    %c0_59 = arith.constant 0 : index
    %c0_60 = arith.constant 0 : index
    %85 = vector.load %arg4[%c3_58, %c0_59, %c0_60] : memref<6x32x32xbf16, #tpu.memory_space<vmem>>, vector<1x32x32xbf16>
    %86 = vector.shape_cast %85 : vector<1x32x32xbf16> to vector<32x32xbf16>
    %cst_61 = arith.constant dense<0.000000e+00> : vector<2x32xf32>
    %87 = tpu.matmul %77, %86, %cst_61 {dimension_numbers = #tpu.dot_dimension_numbers<[1], [0], [0], [1], [0, 0, 1, 1], [], []>} : vector<2x32xbf16>, vector<32x32xbf16>, vector<2x32xf32> -> vector<2x32xf32>
    %c3_62 = arith.constant 3 : index
    %c0_63 = arith.constant 0 : index
    %c0_64 = arith.constant 0 : index
    %88 = vector.load %arg6[%c3_62, %c0_63, %c0_64] : memref<6x1x32xf32, #tpu.memory_space<vmem>>, vector<1x1x32xf32>
    %89 = vector.shape_cast %88 : vector<1x1x32xf32> to vector<1x32xf32>
    %90 = vector.broadcast %89 : vector<1x32xf32> to vector<2x32xf32>
    %91 = arith.addf %87, %90 : vector<2x32xf32>
    %92 = arith.addf %84, %91 : vector<2x32xf32>
    %93 = arith.negf %92 : vector<2x32xf32>
    %94 = math.exp %93 : vector<2x32xf32>
    %cst_65 = arith.constant 1.000000e+00 : f32
    %95 = vector.broadcast %cst_65 : f32 to vector<2x32xf32>
    %96 = arith.addf %95, %94 : vector<2x32xf32>
    %97 = arith.divf %95, %96 : vector<2x32xf32>
    %c4 = arith.constant 4 : index
    %c0_66 = arith.constant 0 : index
    %c0_67 = arith.constant 0 : index
    %98 = vector.load %arg3[%c4, %c0_66, %c0_67] : memref<6x32x32xbf16, #tpu.memory_space<vmem>>, vector<1x32x32xbf16>
    %99 = vector.shape_cast %98 : vector<1x32x32xbf16> to vector<32x32xbf16>
    %cst_68 = arith.constant dense<0.000000e+00> : vector<2x32xf32>
    %100 = tpu.matmul %9, %99, %cst_68 {dimension_numbers = #tpu.dot_dimension_numbers<[1], [0], [0], [1], [0, 0, 1, 1], [], []>} : vector<2x32xbf16>, vector<32x32xbf16>, vector<2x32xf32> -> vector<2x32xf32>
    %c4_69 = arith.constant 4 : index
    %c0_70 = arith.constant 0 : index
    %c0_71 = arith.constant 0 : index
    %101 = vector.load %arg5[%c4_69, %c0_70, %c0_71] : memref<6x1x32xf32, #tpu.memory_space<vmem>>, vector<1x1x32xf32>
    %102 = vector.shape_cast %101 : vector<1x1x32xf32> to vector<1x32xf32>
    %103 = vector.broadcast %102 : vector<1x32xf32> to vector<2x32xf32>
    %104 = arith.addf %100, %103 : vector<2x32xf32>
    %c4_72 = arith.constant 4 : index
    %c0_73 = arith.constant 0 : index
    %c0_74 = arith.constant 0 : index
    %105 = vector.load %arg4[%c4_72, %c0_73, %c0_74] : memref<6x32x32xbf16, #tpu.memory_space<vmem>>, vector<1x32x32xbf16>
    %106 = vector.shape_cast %105 : vector<1x32x32xbf16> to vector<32x32xbf16>
    %cst_75 = arith.constant dense<0.000000e+00> : vector<2x32xf32>
    %107 = tpu.matmul %77, %106, %cst_75 {dimension_numbers = #tpu.dot_dimension_numbers<[1], [0], [0], [1], [0, 0, 1, 1], [], []>} : vector<2x32xbf16>, vector<32x32xbf16>, vector<2x32xf32> -> vector<2x32xf32>
    %c4_76 = arith.constant 4 : index
    %c0_77 = arith.constant 0 : index
    %c0_78 = arith.constant 0 : index
    %108 = vector.load %arg6[%c4_76, %c0_77, %c0_78] : memref<6x1x32xf32, #tpu.memory_space<vmem>>, vector<1x1x32xf32>
    %109 = vector.shape_cast %108 : vector<1x1x32xf32> to vector<1x32xf32>
    %110 = vector.broadcast %109 : vector<1x32xf32> to vector<2x32xf32>
    %111 = arith.addf %107, %110 : vector<2x32xf32>
    %112 = arith.addf %104, %111 : vector<2x32xf32>
    %113 = arith.negf %112 : vector<2x32xf32>
    %114 = math.exp %113 : vector<2x32xf32>
    %cst_79 = arith.constant 1.000000e+00 : f32
    %115 = vector.broadcast %cst_79 : f32 to vector<2x32xf32>
    %116 = arith.addf %115, %114 : vector<2x32xf32>
    %117 = arith.divf %115, %116 : vector<2x32xf32>
    %c5 = arith.constant 5 : index
    %c0_80 = arith.constant 0 : index
    %c0_81 = arith.constant 0 : index
    %118 = vector.load %arg3[%c5, %c0_80, %c0_81] : memref<6x32x32xbf16, #tpu.memory_space<vmem>>, vector<1x32x32xbf16>
    %119 = vector.shape_cast %118 : vector<1x32x32xbf16> to vector<32x32xbf16>
    %cst_82 = arith.constant dense<0.000000e+00> : vector<2x32xf32>
    %120 = tpu.matmul %9, %119, %cst_82 {dimension_numbers = #tpu.dot_dimension_numbers<[1], [0], [0], [1], [0, 0, 1, 1], [], []>} : vector<2x32xbf16>, vector<32x32xbf16>, vector<2x32xf32> -> vector<2x32xf32>
    %c5_83 = arith.constant 5 : index
    %c0_84 = arith.constant 0 : index
    %c0_85 = arith.constant 0 : index
    %121 = vector.load %arg5[%c5_83, %c0_84, %c0_85] : memref<6x1x32xf32, #tpu.memory_space<vmem>>, vector<1x1x32xf32>
    %122 = vector.shape_cast %121 : vector<1x1x32xf32> to vector<1x32xf32>
    %123 = vector.broadcast %122 : vector<1x32xf32> to vector<2x32xf32>
    %124 = arith.addf %120, %123 : vector<2x32xf32>
    %c5_86 = arith.constant 5 : index
    %c0_87 = arith.constant 0 : index
    %c0_88 = arith.constant 0 : index
    %125 = vector.load %arg4[%c5_86, %c0_87, %c0_88] : memref<6x32x32xbf16, #tpu.memory_space<vmem>>, vector<1x32x32xbf16>
    %126 = vector.shape_cast %125 : vector<1x32x32xbf16> to vector<32x32xbf16>
    %cst_89 = arith.constant dense<0.000000e+00> : vector<2x32xf32>
    %127 = tpu.matmul %77, %126, %cst_89 {dimension_numbers = #tpu.dot_dimension_numbers<[1], [0], [0], [1], [0, 0, 1, 1], [], []>} : vector<2x32xbf16>, vector<32x32xbf16>, vector<2x32xf32> -> vector<2x32xf32>
    %c5_90 = arith.constant 5 : index
    %c0_91 = arith.constant 0 : index
    %c0_92 = arith.constant 0 : index
    %128 = vector.load %arg6[%c5_90, %c0_91, %c0_92] : memref<6x1x32xf32, #tpu.memory_space<vmem>>, vector<1x1x32xf32>
    %129 = vector.shape_cast %128 : vector<1x1x32xf32> to vector<1x32xf32>
    %130 = vector.broadcast %129 : vector<1x32xf32> to vector<2x32xf32>
    %131 = arith.addf %127, %130 : vector<2x32xf32>
    %132 = arith.mulf %97, %131 : vector<2x32xf32>
    %133 = arith.addf %124, %132 : vector<2x32xf32>
    %134 = math.tanh %133 : vector<2x32xf32>
    %cst_93 = arith.constant 1.000000e+00 : f32
    %135 = vector.broadcast %cst_93 : f32 to vector<2x32xf32>
    %136 = arith.subf %135, %117 : vector<2x32xf32>
    %137 = arith.mulf %136, %134 : vector<2x32xf32>
    %138 = arith.mulf %117, %76 : vector<2x32xf32>
    %139 = arith.addf %137, %138 : vector<2x32xf32>
    %140 = tpu.concatenate %74, %139 in 1 : vector<2x32xf32>, vector<2x32xf32> -> vector<2x64xf32>
    %141 = arith.truncf %140 : vector<2x64xf32> to vector<2x64xbf16>
    %c2_94 = arith.constant 2 : index
    %c0_95 = arith.constant 0 : index
    %c0_96 = arith.constant 0 : index
    %142 = vector.load %arg2[%c2_94, %c0_95, %c0_96] : memref<4x2x32xf32, #tpu.memory_space<vmem>>, vector<1x2x32xf32>
    %143 = vector.shape_cast %142 : vector<1x2x32xf32> to vector<2x32xf32>
    %144 = arith.truncf %143 : vector<2x32xf32> to vector<2x32xbf16>
    %c0_97 = arith.constant 0 : index
    %c0_98 = arith.constant 0 : index
    %c0_99 = arith.constant 0 : index
    %145 = vector.load %arg7[%c0_97, %c0_98, %c0_99] : memref<6x64x32xbf16, #tpu.memory_space<vmem>>, vector<1x64x32xbf16>
    %146 = vector.shape_cast %145 : vector<1x64x32xbf16> to vector<64x32xbf16>
    %cst_100 = arith.constant dense<0.000000e+00> : vector<2x32xf32>
    %147 = tpu.matmul %141, %146, %cst_100 {dimension_numbers = #tpu.dot_dimension_numbers<[1], [0], [0], [1], [0, 0, 1, 1], [], []>} : vector<2x64xbf16>, vector<64x32xbf16>, vector<2x32xf32> -> vector<2x32xf32>
    %c0_101 = arith.constant 0 : index
    %c0_102 = arith.constant 0 : index
    %c0_103 = arith.constant 0 : index
    %148 = vector.load %arg9[%c0_101, %c0_102, %c0_103] : memref<6x1x32xf32, #tpu.memory_space<vmem>>, vector<1x1x32xf32>
    %149 = vector.shape_cast %148 : vector<1x1x32xf32> to vector<1x32xf32>
    %150 = vector.broadcast %149 : vector<1x32xf32> to vector<2x32xf32>
    %151 = arith.addf %147, %150 : vector<2x32xf32>
    %c0_104 = arith.constant 0 : index
    %c0_105 = arith.constant 0 : index
    %c0_106 = arith.constant 0 : index
    %152 = vector.load %arg8[%c0_104, %c0_105, %c0_106] : memref<6x32x32xbf16, #tpu.memory_space<vmem>>, vector<1x32x32xbf16>
    %153 = vector.shape_cast %152 : vector<1x32x32xbf16> to vector<32x32xbf16>
    %cst_107 = arith.constant dense<0.000000e+00> : vector<2x32xf32>
    %154 = tpu.matmul %144, %153, %cst_107 {dimension_numbers = #tpu.dot_dimension_numbers<[1], [0], [0], [1], [0, 0, 1, 1], [], []>} : vector<2x32xbf16>, vector<32x32xbf16>, vector<2x32xf32> -> vector<2x32xf32>
    %c0_108 = arith.constant 0 : index
    %c0_109 = arith.constant 0 : index
    %c0_110 = arith.constant 0 : index
    %155 = vector.load %arg10[%c0_108, %c0_109, %c0_110] : memref<6x1x32xf32, #tpu.memory_space<vmem>>, vector<1x1x32xf32>
    %156 = vector.shape_cast %155 : vector<1x1x32xf32> to vector<1x32xf32>
    %157 = vector.broadcast %156 : vector<1x32xf32> to vector<2x32xf32>
    %158 = arith.addf %154, %157 : vector<2x32xf32>
    %159 = arith.addf %151, %158 : vector<2x32xf32>
    %160 = arith.negf %159 : vector<2x32xf32>
    %161 = math.exp %160 : vector<2x32xf32>
    %cst_111 = arith.constant 1.000000e+00 : f32
    %162 = vector.broadcast %cst_111 : f32 to vector<2x32xf32>
    %163 = arith.addf %162, %161 : vector<2x32xf32>
    %164 = arith.divf %162, %163 : vector<2x32xf32>
    %c1_112 = arith.constant 1 : index
    %c0_113 = arith.constant 0 : index
    %c0_114 = arith.constant 0 : index
    %165 = vector.load %arg7[%c1_112, %c0_113, %c0_114] : memref<6x64x32xbf16, #tpu.memory_space<vmem>>, vector<1x64x32xbf16>
    %166 = vector.shape_cast %165 : vector<1x64x32xbf16> to vector<64x32xbf16>
    %cst_115 = arith.constant dense<0.000000e+00> : vector<2x32xf32>
    %167 = tpu.matmul %141, %166, %cst_115 {dimension_numbers = #tpu.dot_dimension_numbers<[1], [0], [0], [1], [0, 0, 1, 1], [], []>} : vector<2x64xbf16>, vector<64x32xbf16>, vector<2x32xf32> -> vector<2x32xf32>
    %c1_116 = arith.constant 1 : index
    %c0_117 = arith.constant 0 : index
    %c0_118 = arith.constant 0 : index
    %168 = vector.load %arg9[%c1_116, %c0_117, %c0_118] : memref<6x1x32xf32, #tpu.memory_space<vmem>>, vector<1x1x32xf32>
    %169 = vector.shape_cast %168 : vector<1x1x32xf32> to vector<1x32xf32>
    %170 = vector.broadcast %169 : vector<1x32xf32> to vector<2x32xf32>
    %171 = arith.addf %167, %170 : vector<2x32xf32>
    %c1_119 = arith.constant 1 : index
    %c0_120 = arith.constant 0 : index
    %c0_121 = arith.constant 0 : index
    %172 = vector.load %arg8[%c1_119, %c0_120, %c0_121] : memref<6x32x32xbf16, #tpu.memory_space<vmem>>, vector<1x32x32xbf16>
    %173 = vector.shape_cast %172 : vector<1x32x32xbf16> to vector<32x32xbf16>
    %cst_122 = arith.constant dense<0.000000e+00> : vector<2x32xf32>
    %174 = tpu.matmul %144, %173, %cst_122 {dimension_numbers = #tpu.dot_dimension_numbers<[1], [0], [0], [1], [0, 0, 1, 1], [], []>} : vector<2x32xbf16>, vector<32x32xbf16>, vector<2x32xf32> -> vector<2x32xf32>
    %c1_123 = arith.constant 1 : index
    %c0_124 = arith.constant 0 : index
    %c0_125 = arith.constant 0 : index
    %175 = vector.load %arg10[%c1_123, %c0_124, %c0_125] : memref<6x1x32xf32, #tpu.memory_space<vmem>>, vector<1x1x32xf32>
    %176 = vector.shape_cast %175 : vector<1x1x32xf32> to vector<1x32xf32>
    %177 = vector.broadcast %176 : vector<1x32xf32> to vector<2x32xf32>
    %178 = arith.addf %174, %177 : vector<2x32xf32>
    %179 = arith.addf %171, %178 : vector<2x32xf32>
    %180 = arith.negf %179 : vector<2x32xf32>
    %181 = math.exp %180 : vector<2x32xf32>
    %cst_126 = arith.constant 1.000000e+00 : f32
    %182 = vector.broadcast %cst_126 : f32 to vector<2x32xf32>
    %183 = arith.addf %182, %181 : vector<2x32xf32>
    %184 = arith.divf %182, %183 : vector<2x32xf32>
    %c2_127 = arith.constant 2 : index
    %c0_128 = arith.constant 0 : index
    %c0_129 = arith.constant 0 : index
    %185 = vector.load %arg7[%c2_127, %c0_128, %c0_129] : memref<6x64x32xbf16, #tpu.memory_space<vmem>>, vector<1x64x32xbf16>
    %186 = vector.shape_cast %185 : vector<1x64x32xbf16> to vector<64x32xbf16>
    %cst_130 = arith.constant dense<0.000000e+00> : vector<2x32xf32>
    %187 = tpu.matmul %141, %186, %cst_130 {dimension_numbers = #tpu.dot_dimension_numbers<[1], [0], [0], [1], [0, 0, 1, 1], [], []>} : vector<2x64xbf16>, vector<64x32xbf16>, vector<2x32xf32> -> vector<2x32xf32>
    %c2_131 = arith.constant 2 : index
    %c0_132 = arith.constant 0 : index
    %c0_133 = arith.constant 0 : index
    %188 = vector.load %arg9[%c2_131, %c0_132, %c0_133] : memref<6x1x32xf32, #tpu.memory_space<vmem>>, vector<1x1x32xf32>
    %189 = vector.shape_cast %188 : vector<1x1x32xf32> to vector<1x32xf32>
    %190 = vector.broadcast %189 : vector<1x32xf32> to vector<2x32xf32>
    %191 = arith.addf %187, %190 : vector<2x32xf32>
    %c2_134 = arith.constant 2 : index
    %c0_135 = arith.constant 0 : index
    %c0_136 = arith.constant 0 : index
    %192 = vector.load %arg8[%c2_134, %c0_135, %c0_136] : memref<6x32x32xbf16, #tpu.memory_space<vmem>>, vector<1x32x32xbf16>
    %193 = vector.shape_cast %192 : vector<1x32x32xbf16> to vector<32x32xbf16>
    %cst_137 = arith.constant dense<0.000000e+00> : vector<2x32xf32>
    %194 = tpu.matmul %144, %193, %cst_137 {dimension_numbers = #tpu.dot_dimension_numbers<[1], [0], [0], [1], [0, 0, 1, 1], [], []>} : vector<2x32xbf16>, vector<32x32xbf16>, vector<2x32xf32> -> vector<2x32xf32>
    %c2_138 = arith.constant 2 : index
    %c0_139 = arith.constant 0 : index
    %c0_140 = arith.constant 0 : index
    %195 = vector.load %arg10[%c2_138, %c0_139, %c0_140] : memref<6x1x32xf32, #tpu.memory_space<vmem>>, vector<1x1x32xf32>
    %196 = vector.shape_cast %195 : vector<1x1x32xf32> to vector<1x32xf32>
    %197 = vector.broadcast %196 : vector<1x32xf32> to vector<2x32xf32>
    %198 = arith.addf %194, %197 : vector<2x32xf32>
    %199 = arith.mulf %164, %198 : vector<2x32xf32>
    %200 = arith.addf %191, %199 : vector<2x32xf32>
    %201 = math.tanh %200 : vector<2x32xf32>
    %cst_141 = arith.constant 1.000000e+00 : f32
    %202 = vector.broadcast %cst_141 : f32 to vector<2x32xf32>
    %203 = arith.subf %202, %184 : vector<2x32xf32>
    %204 = arith.mulf %203, %201 : vector<2x32xf32>
    %205 = arith.mulf %184, %143 : vector<2x32xf32>
    %206 = arith.addf %204, %205 : vector<2x32xf32>
    %c3_142 = arith.constant 3 : index
    %c0_143 = arith.constant 0 : index
    %c0_144 = arith.constant 0 : index
    %207 = vector.load %arg2[%c3_142, %c0_143, %c0_144] : memref<4x2x32xf32, #tpu.memory_space<vmem>>, vector<1x2x32xf32>
    %208 = vector.shape_cast %207 : vector<1x2x32xf32> to vector<2x32xf32>
    %209 = arith.truncf %208 : vector<2x32xf32> to vector<2x32xbf16>
    %c3_145 = arith.constant 3 : index
    %c0_146 = arith.constant 0 : index
    %c0_147 = arith.constant 0 : index
    %210 = vector.load %arg7[%c3_145, %c0_146, %c0_147] : memref<6x64x32xbf16, #tpu.memory_space<vmem>>, vector<1x64x32xbf16>
    %211 = vector.shape_cast %210 : vector<1x64x32xbf16> to vector<64x32xbf16>
    %cst_148 = arith.constant dense<0.000000e+00> : vector<2x32xf32>
    %212 = tpu.matmul %141, %211, %cst_148 {dimension_numbers = #tpu.dot_dimension_numbers<[1], [0], [0], [1], [0, 0, 1, 1], [], []>} : vector<2x64xbf16>, vector<64x32xbf16>, vector<2x32xf32> -> vector<2x32xf32>
    %c3_149 = arith.constant 3 : index
    %c0_150 = arith.constant 0 : index
    %c0_151 = arith.constant 0 : index
    %213 = vector.load %arg9[%c3_149, %c0_150, %c0_151] : memref<6x1x32xf32, #tpu.memory_space<vmem>>, vector<1x1x32xf32>
    %214 = vector.shape_cast %213 : vector<1x1x32xf32> to vector<1x32xf32>
    %215 = vector.broadcast %214 : vector<1x32xf32> to vector<2x32xf32>
    %216 = arith.addf %212, %215 : vector<2x32xf32>
    %c3_152 = arith.constant 3 : index
    %c0_153 = arith.constant 0 : index
    %c0_154 = arith.constant 0 : index
    %217 = vector.load %arg8[%c3_152, %c0_153, %c0_154] : memref<6x32x32xbf16, #tpu.memory_space<vmem>>, vector<1x32x32xbf16>
    %218 = vector.shape_cast %217 : vector<1x32x32xbf16> to vector<32x32xbf16>
    %cst_155 = arith.constant dense<0.000000e+00> : vector<2x32xf32>
    %219 = tpu.matmul %209, %218, %cst_155 {dimension_numbers = #tpu.dot_dimension_numbers<[1], [0], [0], [1], [0, 0, 1, 1], [], []>} : vector<2x32xbf16>, vector<32x32xbf16>, vector<2x32xf32> -> vector<2x32xf32>
    %c3_156 = arith.constant 3 : index
    %c0_157 = arith.constant 0 : index
    %c0_158 = arith.constant 0 : index
    %220 = vector.load %arg10[%c3_156, %c0_157, %c0_158] : memref<6x1x32xf32, #tpu.memory_space<vmem>>, vector<1x1x32xf32>
    %221 = vector.shape_cast %220 : vector<1x1x32xf32> to vector<1x32xf32>
    %222 = vector.broadcast %221 : vector<1x32xf32> to vector<2x32xf32>
    %223 = arith.addf %219, %222 : vector<2x32xf32>
    %224 = arith.addf %216, %223 : vector<2x32xf32>
    %225 = arith.negf %224 : vector<2x32xf32>
    %226 = math.exp %225 : vector<2x32xf32>
    %cst_159 = arith.constant 1.000000e+00 : f32
    %227 = vector.broadcast %cst_159 : f32 to vector<2x32xf32>
    %228 = arith.addf %227, %226 : vector<2x32xf32>
    %229 = arith.divf %227, %228 : vector<2x32xf32>
    %c4_160 = arith.constant 4 : index
    %c0_161 = arith.constant 0 : index
    %c0_162 = arith.constant 0 : index
    %230 = vector.load %arg7[%c4_160, %c0_161, %c0_162] : memref<6x64x32xbf16, #tpu.memory_space<vmem>>, vector<1x64x32xbf16>
    %231 = vector.shape_cast %230 : vector<1x64x32xbf16> to vector<64x32xbf16>
    %cst_163 = arith.constant dense<0.000000e+00> : vector<2x32xf32>
    %232 = tpu.matmul %141, %231, %cst_163 {dimension_numbers = #tpu.dot_dimension_numbers<[1], [0], [0], [1], [0, 0, 1, 1], [], []>} : vector<2x64xbf16>, vector<64x32xbf16>, vector<2x32xf32> -> vector<2x32xf32>
    %c4_164 = arith.constant 4 : index
    %c0_165 = arith.constant 0 : index
    %c0_166 = arith.constant 0 : index
    %233 = vector.load %arg9[%c4_164, %c0_165, %c0_166] : memref<6x1x32xf32, #tpu.memory_space<vmem>>, vector<1x1x32xf32>
    %234 = vector.shape_cast %233 : vector<1x1x32xf32> to vector<1x32xf32>
    %235 = vector.broadcast %234 : vector<1x32xf32> to vector<2x32xf32>
    %236 = arith.addf %232, %235 : vector<2x32xf32>
    %c4_167 = arith.constant 4 : index
    %c0_168 = arith.constant 0 : index
    %c0_169 = arith.constant 0 : index
    %237 = vector.load %arg8[%c4_167, %c0_168, %c0_169] : memref<6x32x32xbf16, #tpu.memory_space<vmem>>, vector<1x32x32xbf16>
    %238 = vector.shape_cast %237 : vector<1x32x32xbf16> to vector<32x32xbf16>
    %cst_170 = arith.constant dense<0.000000e+00> : vector<2x32xf32>
    %239 = tpu.matmul %209, %238, %cst_170 {dimension_numbers = #tpu.dot_dimension_numbers<[1], [0], [0], [1], [0, 0, 1, 1], [], []>} : vector<2x32xbf16>, vector<32x32xbf16>, vector<2x32xf32> -> vector<2x32xf32>
    %c4_171 = arith.constant 4 : index
    %c0_172 = arith.constant 0 : index
    %c0_173 = arith.constant 0 : index
    %240 = vector.load %arg10[%c4_171, %c0_172, %c0_173] : memref<6x1x32xf32, #tpu.memory_space<vmem>>, vector<1x1x32xf32>
    %241 = vector.shape_cast %240 : vector<1x1x32xf32> to vector<1x32xf32>
    %242 = vector.broadcast %241 : vector<1x32xf32> to vector<2x32xf32>
    %243 = arith.addf %239, %242 : vector<2x32xf32>
    %244 = arith.addf %236, %243 : vector<2x32xf32>
    %245 = arith.negf %244 : vector<2x32xf32>
    %246 = math.exp %245 : vector<2x32xf32>
    %cst_174 = arith.constant 1.000000e+00 : f32
    %247 = vector.broadcast %cst_174 : f32 to vector<2x32xf32>
    %248 = arith.addf %247, %246 : vector<2x32xf32>
    %249 = arith.divf %247, %248 : vector<2x32xf32>
    %c5_175 = arith.constant 5 : index
    %c0_176 = arith.constant 0 : index
    %c0_177 = arith.constant 0 : index
    %250 = vector.load %arg7[%c5_175, %c0_176, %c0_177] : memref<6x64x32xbf16, #tpu.memory_space<vmem>>, vector<1x64x32xbf16>
    %251 = vector.shape_cast %250 : vector<1x64x32xbf16> to vector<64x32xbf16>
    %cst_178 = arith.constant dense<0.000000e+00> : vector<2x32xf32>
    %252 = tpu.matmul %141, %251, %cst_178 {dimension_numbers = #tpu.dot_dimension_numbers<[1], [0], [0], [1], [0, 0, 1, 1], [], []>} : vector<2x64xbf16>, vector<64x32xbf16>, vector<2x32xf32> -> vector<2x32xf32>
    %c5_179 = arith.constant 5 : index
    %c0_180 = arith.constant 0 : index
    %c0_181 = arith.constant 0 : index
    %253 = vector.load %arg9[%c5_179, %c0_180, %c0_181] : memref<6x1x32xf32, #tpu.memory_space<vmem>>, vector<1x1x32xf32>
    %254 = vector.shape_cast %253 : vector<1x1x32xf32> to vector<1x32xf32>
    %255 = vector.broadcast %254 : vector<1x32xf32> to vector<2x32xf32>
    %256 = arith.addf %252, %255 : vector<2x32xf32>
    %c5_182 = arith.constant 5 : index
    %c0_183 = arith.constant 0 : index
    %c0_184 = arith.constant 0 : index
    %257 = vector.load %arg8[%c5_182, %c0_183, %c0_184] : memref<6x32x32xbf16, #tpu.memory_space<vmem>>, vector<1x32x32xbf16>
    %258 = vector.shape_cast %257 : vector<1x32x32xbf16> to vector<32x32xbf16>
    %cst_185 = arith.constant dense<0.000000e+00> : vector<2x32xf32>
    %259 = tpu.matmul %209, %258, %cst_185 {dimension_numbers = #tpu.dot_dimension_numbers<[1], [0], [0], [1], [0, 0, 1, 1], [], []>} : vector<2x32xbf16>, vector<32x32xbf16>, vector<2x32xf32> -> vector<2x32xf32>
    %c5_186 = arith.constant 5 : index
    %c0_187 = arith.constant 0 : index
    %c0_188 = arith.constant 0 : index
    %260 = vector.load %arg10[%c5_186, %c0_187, %c0_188] : memref<6x1x32xf32, #tpu.memory_space<vmem>>, vector<1x1x32xf32>
    %261 = vector.shape_cast %260 : vector<1x1x32xf32> to vector<1x32xf32>
    %262 = vector.broadcast %261 : vector<1x32xf32> to vector<2x32xf32>
    %263 = arith.addf %259, %262 : vector<2x32xf32>
    %264 = arith.mulf %229, %263 : vector<2x32xf32>
    %265 = arith.addf %256, %264 : vector<2x32xf32>
    %266 = math.tanh %265 : vector<2x32xf32>
    %cst_189 = arith.constant 1.000000e+00 : f32
    %267 = vector.broadcast %cst_189 : f32 to vector<2x32xf32>
    %268 = arith.subf %267, %249 : vector<2x32xf32>
    %269 = arith.mulf %268, %266 : vector<2x32xf32>
    %270 = arith.mulf %249, %208 : vector<2x32xf32>
    %271 = arith.addf %269, %270 : vector<2x32xf32>
    %272 = tpu.concatenate %206, %271 in 1 : vector<2x32xf32>, vector<2x32xf32> -> vector<2x64xf32>
    %273 = arith.truncf %272 : vector<2x64xf32> to vector<2x64xbf16>
    %c0_190 = arith.constant 0 : index
    %c0_191 = arith.constant 0 : index
    %274 = vector.load %arg11[%c0_190, %c0_191] : memref<64x128xbf16, #tpu.memory_space<vmem>>, vector<64x128xbf16>
    %cst_192 = arith.constant dense<0.000000e+00> : vector<2x128xf32>
    %275 = tpu.matmul %273, %274, %cst_192 {dimension_numbers = #tpu.dot_dimension_numbers<[1], [0], [0], [1], [0, 0, 1, 1], [], []>} : vector<2x64xbf16>, vector<64x128xbf16>, vector<2x128xf32> -> vector<2x128xf32>
    %c0_193 = arith.constant 0 : index
    %c0_194 = arith.constant 0 : index
    %276 = vector.load %arg12[%c0_193, %c0_194] : memref<1x128xf32, #tpu.memory_space<vmem>>, vector<1x128xf32>
    %277 = vector.broadcast %276 : vector<1x128xf32> to vector<2x128xf32>
    %278 = arith.addf %275, %277 : vector<2x128xf32>
    %cst_195 = arith.constant dense<0xFF800000> : vector<2xf32>
    %279 = vector.multi_reduction <maximumf>, %278, %cst_195 [1] : vector<2x128xf32> to vector<2xf32>
    %280 = vector.shape_cast %279 : vector<2xf32> to vector<2x1xf32>
    %281 = vector.broadcast %280 : vector<2x1xf32> to vector<2x128xf32>
    %282 = arith.subf %278, %281 : vector<2x128xf32>
    %283 = math.exp %282 : vector<2x128xf32>
    %cst_196 = arith.constant dense<0.000000e+00> : vector<2xf32>
    %284 = vector.multi_reduction <add>, %283, %cst_196 [1] : vector<2x128xf32> to vector<2xf32>
    %285 = vector.shape_cast %284 : vector<2xf32> to vector<2x1xf32>
    %286 = math.log %285 : vector<2x1xf32>
    %287 = vector.broadcast %286 : vector<2x1xf32> to vector<2x128xf32>
    %288 = arith.subf %282, %287 : vector<2x128xf32>
    %c0_197 = arith.constant 0 : index
    %c0_198 = arith.constant 0 : index
    %289 = vector.load %arg13[%c0_197, %c0_198] : memref<2x128xf32, #tpu.memory_space<vmem>>, vector<2x128xf32>
    tpu.vector_store %arg13[%c0_197, %c0_198], %288 {strides = array<i32>} : memref<2x128xf32, #tpu.memory_space<vmem>>, vector<2x128xf32>,
    %290 = tpu.concatenate %74, %139, %206, %271 in 1 : vector<2x32xf32>, vector<2x32xf32>, vector<2x32xf32>, vector<2x32xf32> -> vector<2x128xf32>
    %c0_199 = arith.constant 0 : index
    %c0_200 = arith.constant 0 : index
    %291 = vector.load %arg14[%c0_199, %c0_200] : memref<2x128xf32, #tpu.memory_space<vmem>>, vector<2x128xf32>
    tpu.vector_store %arg14[%c0_199, %c0_200], %290 {strides = array<i32>} : memref<2x128xf32, #tpu.memory_space<vmem>>, vector<2x128xf32>,
    return
  }
}

</mosaic_0001>

<llo_original>
// kernel: decoder_forward.1
$region0: #{decoder_forward.1}
  #allocation0 [shape = 'u32[]', space=smem, size = 0x4, offset = 0x4, fixed_abs, tag = 'smem constant byte address 0x4 - core index']
  #allocation1 [shape = 'u32[144,128]{1,0:T(1,128)}', space=vmem, size = 0x12000, scoped, tag = 'internal scratch']
  %s0 = inlined_call_operand.vmem [shape: s32[2,1], index: 0, kind: input, shape index: {}]
  %s1 = inlined_call_operand.vmem [shape: bf16[128,32], index: 1, kind: input, shape index: {}]
  %s2 = inlined_call_operand.vmem [shape: f32[4,2,32], index: 2, kind: input, shape index: {}]
  %s3 = inlined_call_operand.vmem [shape: bf16[6,32,32], index: 3, kind: input, shape index: {}]
  %s4 = inlined_call_operand.vmem [shape: bf16[6,32,32], index: 4, kind: input, shape index: {}]
  %s5 = inlined_call_operand.vmem [shape: f32[6,1,32], index: 5, kind: input, shape index: {}]
  %s6 = inlined_call_operand.vmem [shape: f32[6,1,32], index: 6, kind: input, shape index: {}]
  %s7 = inlined_call_operand.vmem [shape: bf16[6,64,32], index: 7, kind: input, shape index: {}]
  %s8 = inlined_call_operand.vmem [shape: bf16[6,32,32], index: 8, kind: input, shape index: {}]
  %s9 = inlined_call_operand.vmem [shape: f32[6,1,32], index: 9, kind: input, shape index: {}]
  %s10 = inlined_call_operand.hbm [shape: f32[6,1,32], index: 10, kind: input, shape index: {}]
  %s11 = inlined_call_operand.hbm [shape: bf16[64,128], index: 11, kind: input, shape index: {}]
  %s12 = inlined_call_operand.vmem [shape: f32[1,128], index: 12, kind: input, shape index: {}]
  %s13 = inlined_call_operand.hbm [shape: f32[2,128], index: 13, kind: output, shape index: {0}]
  %s14 = inlined_call_operand.vmem [shape: f32[2,128], index: 14, kind: output, shape index: {1}]
  %15 = xla_tuple %s13, %s14
  %s16 = sld [smem:[#allocation0]]
  $region78: #{decoder_forward.1} parent=0
    _
  %s18 = ssub.s32 1, %s16
  %s19 = scalar_select 0, %s18, %s16
  $region1: #{decoder_forward.1} parent=0
    #allocation2 [shape = 'u8[3072]{0}', space=vmem, size = 0xc00, scoped, tag = 'input window, operand 10, single buffered']
    #allocation3 [shape = 's32[1]{0}', space=sflag, size = 0x4, scoped, tag = 'scoped memory for decoder_forward.1']
    #allocation4 [shape = 's32[1]{0}', space=sflag, size = 0x4, scoped, tag = 'scoped memory for decoder_forward.1']
    #allocation5 [shape = 'u8[16384]{0}', space=vmem, size = 0x4000, scoped, tag = 'input window, operand 11, single buffered']
    #allocation6 [shape = 's32[1]{0}', space=sflag, size = 0x4, scoped, tag = 'scoped memory for decoder_forward.1']
    #allocation7 [shape = 'u8[1024]{0}', space=vmem, size = 0x400, scoped, tag = 'output window, operand 0, single buffered']
    %20 = vsyncpa [#allocation3], 0
    %21 = vsyncpa [#allocation6], 0
    %22 = vsyncpa [#allocation4], 0
    // Predicated region
    $region2: #{decoder_forward.1} parent=1 // pred_check
      _
    $region3: #{decoder_forward.1} parent=1 // pred_check_branch
      %24 = sbr.rel (0) target = $region5
    $region4: #{decoder_forward.1} parent=1 // pred_region
      _
    $region5: #{decoder_forward.1} parent=1 // pred_fallthru
      _
    // Predicated region
    $region6: #{decoder_forward.1} parent=1 // pred_check
      _
    $region7: #{decoder_forward.1} parent=1 // pred_check_branch
      %26 = sbr.rel (0) target = $region9
    $region8: #{decoder_forward.1} parent=1 // pred_region
      _
    $region9: #{decoder_forward.1} parent=1 // pred_fallthru
      _
    // Predicated region
    $region10: #{decoder_forward.1} parent=1 // pred_check
      _
    $region11: #{decoder_forward.1} parent=1 // pred_check_branch
      %28 = sbr.rel (0) target = $region13
    $region12: #{decoder_forward.1} parent=1 // pred_region
      _
    $region13: #{decoder_forward.1} parent=1 // pred_fallthru
      _
    // Predicated region
    $region14: #{decoder_forward.1} parent=1 // pred_check
      _
    $region15: #{decoder_forward.1} parent=1 // pred_check_branch
      %30 = sbr.rel (0) target = $region17
    $region16: #{decoder_forward.1} parent=1 // pred_region
      _
    $region17: #{decoder_forward.1} parent=1 // pred_fallthru
      _
    // Predicated region
    $region18: #{decoder_forward.1} parent=1 // pred_check
      _
    $region19: #{decoder_forward.1} parent=1 // pred_check_branch
      %32 = sbr.rel (0) target = $region21
    $region20: #{decoder_forward.1} parent=1 // pred_region
      _
    $region21: #{decoder_forward.1} parent=1 // pred_fallthru
      _
    // Predicated region
    $region22: #{decoder_forward.1} parent=1 // pred_check
      _
    $region23: #{decoder_forward.1} parent=1 // pred_check_branch
      %34 = sbr.rel (0) target = $region25
    $region24: #{decoder_forward.1} parent=1 // pred_region
      _
    $region25: #{decoder_forward.1} parent=1 // pred_fallthru
      _
    // Predicated region
    $region26: #{decoder_forward.1} parent=1 // pred_check
      _
    $region27: #{decoder_forward.1} parent=1 // pred_check_branch
      %36 = sbr.rel (0) target = $region29
    $region28: #{decoder_forward.1} parent=1 // pred_region
      _
    $region29: #{decoder_forward.1} parent=1 // pred_fallthru
      _
    // Predicated region
    $region30: #{decoder_forward.1} parent=1 // pred_check
      _
    $region31: #{decoder_forward.1} parent=1 // pred_check_branch
      %38 = sbr.rel (0) target = $region33
    $region32: #{decoder_forward.1} parent=1 // pred_region
      _
    $region33: #{decoder_forward.1} parent=1 // pred_fallthru
      _
    // Predicated region
    $region34: #{decoder_forward.1} parent=1 // pred_check
      _
    $region35: #{decoder_forward.1} parent=1 // pred_check_branch
      %40 = sbr.rel (0) target = $region37
    $region36: #{decoder_forward.1} parent=1 // pred_region
      _
    $region37: #{decoder_forward.1} parent=1 // pred_fallthru
      _
    // Predicated region
    $region38: #{decoder_forward.1} parent=1 // pred_check
      _
    $region39: #{decoder_forward.1} parent=1 // pred_check_branch
      %42 = sbr.rel (0) target = $region41
    $region40: #{decoder_forward.1} parent=1 // pred_region
      _
    $region41: #{decoder_forward.1} parent=1 // pred_fallthru
      _
    // Predicated region
    $region42: #{decoder_forward.1} parent=1 // pred_check
      _
    $region43: #{decoder_forward.1} parent=1 // pred_check_branch
      %44 = sbr.rel (0) target = $region45
    $region44: #{decoder_forward.1} parent=1 // pred_region
      %s46 = ssub.s32 96, 96
      %47 = vsyncadd [#allocation3], %s46
      %s48 = sshll.u32 [#allocation2], 4
      %s49 = int_to_ptr.vmem [resolvable:$true] %s48
      %54 = dma.hbm_to_vmem [thread:$0]  %s10, 96, %s49, [#allocation3], 16, 16, 1
    $region45: #{decoder_forward.1} parent=1 // pred_fallthru
      _
    // Predicated region
    $region46: #{decoder_forward.1} parent=1 // pred_check
      _
    $region47: #{decoder_forward.1} parent=1 // pred_check_branch
      %56 = sbr.rel (0) target = $region49
    $region48: #{decoder_forward.1} parent=1 // pred_region
      %s58 = ssub.s32 512, 512
      %59 = vsyncadd [#allocation6], %s58
      %s60 = sshll.u32 [#allocation5], 4
      %s61 = int_to_ptr.vmem [resolvable:$true] %s60
      %66 = dma.hbm_to_vmem [thread:$0]  %s11, 512, %s61, [#allocation6], 64, 64, 4
    $region49: #{decoder_forward.1} parent=1 // pred_fallthru
      _
    // Predicated region
    $region50: #{decoder_forward.1} parent=1 // pred_check
      _
    $region51: #{decoder_forward.1} parent=1 // pred_check_branch
      %68 = sbr.rel (0) target = $region53
    $region52: #{decoder_forward.1} parent=1 // pred_region
      _
    $region53: #{decoder_forward.1} parent=1 // pred_fallthru
      _
    // Predicated region
    $region54: #{decoder_forward.1} parent=1 // pred_check
      _
    $region55: #{decoder_forward.1} parent=1 // pred_check_branch
      %70 = sbr.rel (0) target = $region57
    $region56: #{decoder_forward.1} parent=1 // pred_region
      %71 = dma.done [#allocation3], 96
    $region57: #{decoder_forward.1} parent=1 // pred_fallthru
      _
    // Predicated region
    $region58: #{decoder_forward.1} parent=1 // pred_check
      _
    $region59: #{decoder_forward.1} parent=1 // pred_check_branch
      %73 = sbr.rel (0) target = $region61
    $region60: #{decoder_forward.1} parent=1 // pred_region
      %74 = dma.done [#allocation6], 512
    $region61: #{decoder_forward.1} parent=1 // pred_fallthru
      _
    %v76 = vlaneseq
    %v77 = vand.u32 %v76, 127
    %v78 = vld [vmem:[%s0] sm:$0x3]
    %79 = vset.pattern.permute.xlu0 0
    %80 = vperm.xlu0 %79, %v78
    %v81 = vpop.permute.xlu0 %80
    %vm82 = vcmp.eq.s32.totalorder %v77, %v81
    %v83 = vsel %vm82, 1, 0
    %v84 = vcvt.s32.f32 %v83
    %v85 = vpack.c.bf16 %v84, %v84
    %v86 = vld [vmem:[%s1] sm:$0xf]
    %v87 = vld [vmem:[%s1 + $0x4] sm:$0xf]
    %v88 = vld [vmem:[%s1 + $0x8] sm:$0xf]
    %v89 = vld [vmem:[%s1 + $0xc] sm:$0xf]
    %v90 = vld [vmem:[%s1 + $0x10] sm:$0xf]
    %v91 = vld [vmem:[%s1 + $0x14] sm:$0xf]
    %v92 = vld [vmem:[%s1 + $0x18] sm:$0xf]
    %v93 = vld [vmem:[%s1 + $0x1c] sm:$0xf]
    %v94 = vld [vmem:[%s1 + $0x20] sm:$0xf]
    %v95 = vld [vmem:[%s1 + $0x24] sm:$0xf]
    %v96 = vld [vmem:[%s1 + $0x28] sm:$0xf]
    %v97 = vld [vmem:[%s1 + $0x2c] sm:$0xf]
    %v98 = vld [vmem:[%s1 + $0x30] sm:$0xf]
    %v99 = vld [vmem:[%s1 + $0x34] sm:$0xf]
    %v100 = vld [vmem:[%s1 + $0x38] sm:$0xf]
    %v101 = vld [vmem:[%s1 + $0x3c] sm:$0xf]
    %v118 = vunpack.c.l.b16 %v86
    %v119 = vunpack.c.l.b16 %v87
    %v120 = vunpack.c.l.b16 %v88
    %v121 = vunpack.c.l.b16 %v89
    %v122 = vunpack.c.l.b16 %v90
    %v123 = vunpack.c.l.b16 %v91
    %v124 = vunpack.c.l.b16 %v92
    %v125 = vunpack.c.l.b16 %v93
    %v126 = vunpack.c.l.b16 %v94
    %v127 = vunpack.c.l.b16 %v95
    %v128 = vunpack.c.l.b16 %v96
    %v129 = vunpack.c.l.b16 %v97
    %v130 = vunpack.c.l.b16 %v98
    %v131 = vunpack.c.l.b16 %v99
    %v132 = vunpack.c.l.b16 %v100
    %v133 = vunpack.c.l.b16 %v101
    %v134 = vpack.c.b16 %v119, %v118
    %v135 = vpack.c.b16 %v121, %v120
    %v136 = vpack.c.b16 %v123, %v122
    %v137 = vpack.c.b16 %v125, %v124
    %v138 = vpack.c.b16 %v127, %v126
    %v139 = vpack.c.b16 %v129, %v128
    %v140 = vpack.c.b16 %v131, %v130
    %v141 = vpack.c.b16 %v133, %v132
    %150 = vmatprep.subr.bf16.mxu0 0
    %151 = vmatpush1.bf16.msra.mxu0 %v134
    %152 = vmatprep.subr.bf16.mxu0 0
    %153 = vmatpush1.bf16.msra.mxu0 %v135
    %154 = vmatprep.subr.bf16.mxu0 0
    %155 = vmatpush1.bf16.msra.mxu0 %v136
    %156 = vmatprep.subr.bf16.mxu0 0
    %157 = vmatpush1.bf16.msra.mxu0 %v137
    %158 = vmatprep.subr.bf16.mxu0 0
    %159 = vmatpush1.bf16.msra.mxu0 %v138
    %160 = vmatprep.subr.bf16.mxu0 0
    %161 = vmatpush1.bf16.msra.mxu0 %v139
    %162 = vmatprep.subr.bf16.mxu0 0
    %163 = vmatpush1.bf16.msra.mxu0 %v140
    %164 = vmatprep.subr.bf16.mxu0 0
    %165 = vmatpush1.bf16.msra.mxu0 %v141
    %166 = vmatprep.subr.bf16.mxu0 0
    %167 = vmatpush1.bf16.msra.mxu0 0
    %168 = vmatprep.subr.bf16.mxu0 0
    %169 = vmatpush1.bf16.msra.mxu0 0
    %170 = vmatprep.subr.bf16.mxu0 0
    %171 = vmatpush1.bf16.msra.mxu0 0
    %172 = vmatprep.subr.bf16.mxu0 0
    %173 = vmatpush1.bf16.msra.mxu0 0
    %174 = vmatprep.subr.bf16.mxu0 0
    %175 = vmatpush1.bf16.msra.mxu0 0
    %176 = vmatprep.subr.bf16.mxu0 0
    %177 = vmatpush1.bf16.msra.mxu0 0
    %178 = vmatprep.subr.bf16.mxu0 0
    %179 = vmatpush1.bf16.msra.mxu0 0
    %180 = vmatprep.subr.bf16.mxu0 0
    %181 = vmatpush1.bf16.msra.mxu0 0
    %182 = vmatprep.mubr.bf16.mxu0 0
    %183 = vmatmul.mubr.bf16.gmra.mrb[0].mxu0 %v85
    %v184 = vpop.f32.mrb[0].mxu0
    %v185 = vadd.f32 0.0, %v184
    %v186 = vpop.f32.mrb[0].mxu0
    %v187 = vpop.f32.mrb[0].mxu0
    %v188 = vpop.f32.mrb[0].mxu0
    %189 = vdwg.mxu0
    %v190 = vpack.c.bf16 %v185, %v185
    %v191 = vld [vmem:[%s2] sm:$0x3]
    %v192 = vpack.c.bf16 %v191, %v191
    %v193 = vld [vmem:[%s3] sm:$0xf]
    %v194 = vld [vmem:[%s3 + $0x4] sm:$0xf]
    %v195 = vld [vmem:[%s3 + $0x8] sm:$0xf]
    %v196 = vld [vmem:[%s3 + $0xc] sm:$0xf]
    %v197 = vld [vmem:[%s5] sm:$0x1]
    %v199 = vlaneseq
    %v200 = vshrl.u32 %v199, 7
    %v201 = vsub.s32 0, %v200
    %v202 = vrot.slane %v197, %v201
    %v208 = vunpack.c.l.b16 %v193
    %v209 = vunpack.c.l.b16 %v194
    %v210 = vunpack.c.l.b16 %v195
    %v211 = vunpack.c.l.b16 %v196
    %v212 = vpack.c.b16 %v209, %v208
    %v213 = vpack.c.b16 %v211, %v210
    %vm216 = vcmask 261120
    %v218 = vsel %vm216, %v190, 0
    %220 = vmatprep.subr.bf16.mxu0 0
    %221 = vmatpush1.bf16.msra.mxu0 %v212
    %222 = vmatprep.subr.bf16.mxu0 0
    %223 = vmatpush1.bf16.msra.mxu0 %v213
    %224 = vmatprep.subr.bf16.mxu0 0
    %225 = vmatpush1.bf16.msra.mxu0 0
    %226 = vmatprep.subr.bf16.mxu0 0
    %227 = vmatpush1.bf16.msra.mxu0 0
    %228 = vmatprep.subr.bf16.mxu0 0
    %229 = vmatpush1.bf16.msra.mxu0 0
    %230 = vmatprep.subr.bf16.mxu0 0
    %231 = vmatpush1.bf16.msra.mxu0 0
    %232 = vmatprep.subr.bf16.mxu0 0
    %233 = vmatpush1.bf16.msra.mxu0 0
    %234 = vmatprep.subr.bf16.mxu0 0
    %235 = vmatpush1.bf16.msra.mxu0 0
    %236 = vmatprep.subr.bf16.mxu0 0
    %237 = vmatpush1.bf16.msra.mxu0 0
    %238 = vmatprep.subr.bf16.mxu0 0
    %239 = vmatpush1.bf16.msra.mxu0 0
    %240 = vmatprep.subr.bf16.mxu0 0
    %241 = vmatpush1.bf16.msra.mxu0 0
    %242 = vmatprep.subr.bf16.mxu0 0
    %243 = vmatpush1.bf16.msra.mxu0 0
    %244 = vmatprep.subr.bf16.mxu0 0
    %245 = vmatpush1.bf16.msra.mxu0 0
    %246 = vmatprep.subr.bf16.mxu0 0
    %247 = vmatpush1.bf16.msra.mxu0 0
    %248 = vmatprep.subr.bf16.mxu0 0
    %249 = vmatpush1.bf16.msra.mxu0 0
    %250 = vmatprep.subr.bf16.mxu0 0
    %251 = vmatpush1.bf16.msra.mxu0 0
    %252 = vmatprep.mubr.bf16.mxu0 0
    %253 = vmatmul.mubr.bf16.gmra.mrb[0].mxu0 %v218
    %v254 = vpop.f32.mrb[0].mxu0
    %v255 = vadd.f32 %v202, %v254
    %v256 = vpop.f32.mrb[0].mxu0
    %v257 = vpop.f32.mrb[0].mxu0
    %v258 = vpop.f32.mrb[0].mxu0
    %259 = vdwg.mxu0
    %v260 = vld [vmem:[%s4] sm:$0xf]
    %v261 = vld [vmem:[%s4 + $0x4] sm:$0xf]
    %v262 = vld [vmem:[%s4 + $0x8] sm:$0xf]
    %v263 = vld [vmem:[%s4 + $0xc] sm:$0xf]
    %v264 = vld [vmem:[%s6] sm:$0x1]
    %v266 = vlaneseq
    %v267 = vshrl.u32 %v266, 7
    %v268 = vsub.s32 0, %v267
    %v269 = vrot.slane %v264, %v268
    %v275 = vunpack.c.l.b16 %v260
    %v276 = vunpack.c.l.b16 %v261
    %v277 = vunpack.c.l.b16 %v262
    %v278 = vunpack.c.l.b16 %v263
    %v279 = vpack.c.b16 %v276, %v275
    %v280 = vpack.c.b16 %v278, %v277
    %v284 = vsel %vm216, %v192, 0
    %286 = vmatprep.subr.bf16.mxu0 0
    %287 = vmatpush1.bf16.msra.mxu0 %v279
    %288 = vmatprep.subr.bf16.mxu0 0
    %289 = vmatpush1.bf16.msra.mxu0 %v280
    %290 = vmatprep.subr.bf16.mxu0 0
    %291 = vmatpush1.bf16.msra.mxu0 0
    %292 = vmatprep.subr.bf16.mxu0 0
    %293 = vmatpush1.bf16.msra.mxu0 0
    %294 = vmatprep.subr.bf16.mxu0 0
    %295 = vmatpush1.bf16.msra.mxu0 0
    %296 = vmatprep.subr.bf16.mxu0 0
    %297 = vmatpush1.bf16.msra.mxu0 0
    %298 = vmatprep.subr.bf16.mxu0 0
    %299 = vmatpush1.bf16.msra.mxu0 0
    %300 = vmatprep.subr.bf16.mxu0 0
    %301 = vmatpush1.bf16.msra.mxu0 0
    %302 = vmatprep.subr.bf16.mxu0 0
    %303 = vmatpush1.bf16.msra.mxu0 0
    %304 = vmatprep.subr.bf16.mxu0 0
    %305 = vmatpush1.bf16.msra.mxu0 0
    %306 = vmatprep.subr.bf16.mxu0 0
    %307 = vmatpush1.bf16.msra.mxu0 0
    %308 = vmatprep.subr.bf16.mxu0 0
    %309 = vmatpush1.bf16.msra.mxu0 0
    %310 = vmatprep.subr.bf16.mxu0 0
    %311 = vmatpush1.bf16.msra.mxu0 0
    %312 = vmatprep.subr.bf16.mxu0 0
    %313 = vmatpush1.bf16.msra.mxu0 0
    %314 = vmatprep.subr.bf16.mxu0 0
    %315 = vmatpush1.bf16.msra.mxu0 0
    %316 = vmatprep.subr.bf16.mxu0 0
    %317 = vmatpush1.bf16.msra.mxu0 0
    %318 = vmatprep.mubr.bf16.mxu0 0
    %319 = vmatmul.mubr.bf16.gmra.mrb[0].mxu0 %v284
    %v320 = vpop.f32.mrb[0].mxu0
    %v321 = vadd.f32 %v269, %v320
    %v322 = vpop.f32.mrb[0].mxu0
    %v323 = vpop.f32.mrb[0].mxu0
    %v324 = vpop.f32.mrb[0].mxu0
    %325 = vdwg.mxu0
    %v326 = vadd.f32 %v255, %v321
    %v327 = vxor.u32 %v326, 2147483648
    %v328 = vmul.f32 %v327, 1.442695
    %v329 = vpow.pop %v328
    %v330 = vadd.f32 %v329, 1.0
    %v331 = vrcp.pop %v330
    %v332 = vmul.f32 1.0, %v331
    %s333 = scalar_lea.vmem %s3, 16
    %v334 = vld [vmem:[%s333] sm:$0xf]
    %v335 = vld [vmem:[%s333 + $0x4] sm:$0xf]
    %v336 = vld [vmem:[%s333 + $0x8] sm:$0xf]
    %v337 = vld [vmem:[%s333 + $0xc] sm:$0xf]
    %s338 = scalar_lea.vmem %s5, 1
    %v339 = vld [vmem:[%s338] sm:$0x1]
    %v341 = vlaneseq
    %v342 = vshrl.u32 %v341, 7
    %v343 = vsub.s32 0, %v342
    %v344 = vrot.slane %v339, %v343
    %v350 = vunpack.c.l.b16 %v334
    %v351 = vunpack.c.l.b16 %v335
    %v352 = vunpack.c.l.b16 %v336
    %v353 = vunpack.c.l.b16 %v337
    %v354 = vpack.c.b16 %v351, %v350
    %v355 = vpack.c.b16 %v353, %v352
    %358 = vmatprep.subr.bf16.mxu0 0
    %359 = vmatpush1.bf16.msra.mxu0 %v354
    %360 = vmatprep.subr.bf16.mxu0 0
    %361 = vmatpush1.bf16.msra.mxu0 %v355
    %362 = vmatprep.subr.bf16.mxu0 0
    %363 = vmatpush1.bf16.msra.mxu0 0
    %364 = vmatprep.subr.bf16.mxu0 0
    %365 = vmatpush1.bf16.msra.mxu0 0
    %366 = vmatprep.subr.bf16.mxu0 0
    %367 = vmatpush1.bf16.msra.mxu0 0
    %368 = vmatprep.subr.bf16.mxu0 0
    %369 = vmatpush1.bf16.msra.mxu0 0
    %370 = vmatprep.subr.bf16.mxu0 0
    %371 = vmatpush1.bf16.msra.mxu0 0
    %372 = vmatprep.subr.bf16.mxu0 0
    %373 = vmatpush1.bf16.msra.mxu0 0
    %374 = vmatprep.subr.bf16.mxu0 0
    %375 = vmatpush1.bf16.msra.mxu0 0
    %376 = vmatprep.subr.bf16.mxu0 0
    %377 = vmatpush1.bf16.msra.mxu0 0
    %378 = vmatprep.subr.bf16.mxu0 0
    %379 = vmatpush1.bf16.msra.mxu0 0
    %380 = vmatprep.subr.bf16.mxu0 0
    %381 = vmatpush1.bf16.msra.mxu0 0
    %382 = vmatprep.subr.bf16.mxu0 0
    %383 = vmatpush1.bf16.msra.mxu0 0
    %384 = vmatprep.subr.bf16.mxu0 0
    %385 = vmatpush1.bf16.msra.mxu0 0
    %386 = vmatprep.subr.bf16.mxu0 0
    %387 = vmatpush1.bf16.msra.mxu0 0
    %388 = vmatprep.subr.bf16.mxu0 0
    %389 = vmatpush1.bf16.msra.mxu0 0
    %390 = vmatprep.mubr.bf16.mxu0 0
    %391 = vmatmul.mubr.bf16.gmra.mrb[0].mxu0 %v218
    %v392 = vpop.f32.mrb[0].mxu0
    %v393 = vadd.f32 %v344, %v392
    %v394 = vpop.f32.mrb[0].mxu0
    %v395 = vpop.f32.mrb[0].mxu0
    %v396 = vpop.f32.mrb[0].mxu0
    %397 = vdwg.mxu0
    %s398 = scalar_lea.vmem %s4, 16
    %v399 = vld [vmem:[%s398] sm:$0xf]
    %v400 = vld [vmem:[%s398 + $0x4] sm:$0xf]
    %v401 = vld [vmem:[%s398 + $0x8] sm:$0xf]
    %v402 = vld [vmem:[%s398 + $0xc] sm:$0xf]
    %s403 = scalar_lea.vmem %s6, 1
    %v404 = vld [vmem:[%s403] sm:$0x1]
    %v406 = vlaneseq
    %v407 = vshrl.u32 %v406, 7
    %v408 = vsub.s32 0, %v407
    %v409 = vrot.slane %v404, %v408
    %v415 = vunpack.c.l.b16 %v399
    %v416 = vunpack.c.l.b16 %v400
    %v417 = vunpack.c.l.b16 %v401
    %v418 = vunpack.c.l.b16 %v402
    %v419 = vpack.c.b16 %v416, %v415
    %v420 = vpack.c.b16 %v418, %v417
    %423 = vmatprep.subr.bf16.mxu0 0
    %424 = vmatpush1.bf16.msra.mxu0 %v419
    %425 = vmatprep.subr.bf16.mxu0 0
    %426 = vmatpush1.bf16.msra.mxu0 %v420
    %427 = vmatprep.subr.bf16.mxu0 0
    %428 = vmatpush1.bf16.msra.mxu0 0
    %429 = vmatprep.subr.bf16.mxu0 0
    %430 = vmatpush1.bf16.msra.mxu0 0
    %431 = vmatprep.subr.bf16.mxu0 0
    %432 = vmatpush1.bf16.msra.mxu0 0
    %433 = vmatprep.subr.bf16.mxu0 0
    %434 = vmatpush1.bf16.msra.mxu0 0
    %435 = vmatprep.subr.bf16.mxu0 0
    %436 = vmatpush1.bf16.msra.mxu0 0
    %437 = vmatprep.subr.bf16.mxu0 0
    %438 = vmatpush1.bf16.msra.mxu0 0
    %439 = vmatprep.subr.bf16.mxu0 0
    %440 = vmatpush1.bf16.msra.mxu0 0
    %441 = vmatprep.subr.bf16.mxu0 0
    %442 = vmatpush1.bf16.msra.mxu0 0
    %443 = vmatprep.subr.bf16.mxu0 0
    %444 = vmatpush1.bf16.msra.mxu0 0
    %445 = vmatprep.subr.bf16.mxu0 0
    %446 = vmatpush1.bf16.msra.mxu0 0
    %447 = vmatprep.subr.bf16.mxu0 0
    %448 = vmatpush1.bf16.msra.mxu0 0
    %449 = vmatprep.subr.bf16.mxu0 0
    %450 = vmatpush1.bf16.msra.mxu0 0
    %451 = vmatprep.subr.bf16.mxu0 0
    %452 = vmatpush1.bf16.msra.mxu0 0
    %453 = vmatprep.subr.bf16.mxu0 0
    %454 = vmatpush1.bf16.msra.mxu0 0
    %455 = vmatprep.mubr.bf16.mxu0 0
    %456 = vmatmul.mubr.bf16.gmra.mrb[0].mxu0 %v284
    %v457 = vpop.f32.mrb[0].mxu0
    %v458 = vadd.f32 %v409, %v457
    %v459 = vpop.f32.mrb[0].mxu0
    %v460 = vpop.f32.mrb[0].mxu0
    %v461 = vpop.f32.mrb[0].mxu0
    %462 = vdwg.mxu0
    %v463 = vadd.f32 %v393, %v458
    %v464 = vxor.u32 %v463, 2147483648
    %v465 = vmul.f32 %v464, 1.442695
    %v466 = vpow.pop %v465
    %v467 = vadd.f32 %v466, 1.0
    %v468 = vrcp.pop %v467
    %v469 = vmul.f32 1.0, %v468
    %s470 = scalar_lea.vmem %s3, 32
    %v471 = vld [vmem:[%s470] sm:$0xf]
    %v472 = vld [vmem:[%s470 + $0x4] sm:$0xf]
    %v473 = vld [vmem:[%s470 + $0x8] sm:$0xf]
    %v474 = vld [vmem:[%s470 + $0xc] sm:$0xf]
    %s475 = scalar_lea.vmem %s5, 2
    %v476 = vld [vmem:[%s475] sm:$0x1]
    %v478 = vlaneseq
    %v479 = vshrl.u32 %v478, 7
    %v480 = vsub.s32 0, %v479
    %v481 = vrot.slane %v476, %v480
    %v487 = vunpack.c.l.b16 %v471
    %v488 = vunpack.c.l.b16 %v472
    %v489 = vunpack.c.l.b16 %v473
    %v490 = vunpack.c.l.b16 %v474
    %v491 = vpack.c.b16 %v488, %v487
    %v492 = vpack.c.b16 %v490, %v489
    %495 = vmatprep.subr.bf16.mxu0 0
    %496 = vmatpush1.bf16.msra.mxu0 %v491
    %497 = vmatprep.subr.bf16.mxu0 0
    %498 = vmatpush1.bf16.msra.mxu0 %v492
    %499 = vmatprep.subr.bf16.mxu0 0
    %500 = vmatpush1.bf16.msra.mxu0 0
    %501 = vmatprep.subr.bf16.mxu0 0
    %502 = vmatpush1.bf16.msra.mxu0 0
    %503 = vmatprep.subr.bf16.mxu0 0
    %504 = vmatpush1.bf16.msra.mxu0 0
    %505 = vmatprep.subr.bf16.mxu0 0
    %506 = vmatpush1.bf16.msra.mxu0 0
    %507 = vmatprep.subr.bf16.mxu0 0
    %508 = vmatpush1.bf16.msra.mxu0 0
    %509 = vmatprep.subr.bf16.mxu0 0
    %510 = vmatpush1.bf16.msra.mxu0 0
    %511 = vmatprep.subr.bf16.mxu0 0
    %512 = vmatpush1.bf16.msra.mxu0 0
    %513 = vmatprep.subr.bf16.mxu0 0
    %514 = vmatpush1.bf16.msra.mxu0 0
    %515 = vmatprep.subr.bf16.mxu0 0
    %516 = vmatpush1.bf16.msra.mxu0 0
    %517 = vmatprep.subr.bf16.mxu0 0
    %518 = vmatpush1.bf16.msra.mxu0 0
    %519 = vmatprep.subr.bf16.mxu0 0
    %520 = vmatpush1.bf16.msra.mxu0 0
    %521 = vmatprep.subr.bf16.mxu0 0
    %522 = vmatpush1.bf16.msra.mxu0 0
    %523 = vmatprep.subr.bf16.mxu0 0
    %524 = vmatpush1.bf16.msra.mxu0 0
    %525 = vmatprep.subr.bf16.mxu0 0
    %526 = vmatpush1.bf16.msra.mxu0 0
    %527 = vmatprep.mubr.bf16.mxu0 0
    %528 = vmatmul.mubr.bf16.gmra.mrb[0].mxu0 %v218
    %v529 = vpop.f32.mrb[0].mxu0
    %v530 = vadd.f32 %v481, %v529
    %v531 = vpop.f32.mrb[0].mxu0
    %v532 = vpop.f32.mrb[0].mxu0
    %v533 = vpop.f32.mrb[0].mxu0
    %534 = vdwg.mxu0
    %s535 = scalar_lea.vmem %s4, 32
    %v536 = vld [vmem:[%s535] sm:$0xf]
    %v537 = vld [vmem:[%s535 + $0x4] sm:$0xf]
    %v538 = vld [vmem:[%s535 + $0x8] sm:$0xf]
    %v539 = vld [vmem:[%s535 + $0xc] sm:$0xf]
    %s540 = scalar_lea.vmem %s6, 2
    %v541 = vld [vmem:[%s540] sm:$0x1]
    %v543 = vlaneseq
    %v544 = vshrl.u32 %v543, 7
    %v545 = vsub.s32 0, %v544
    %v546 = vrot.slane %v541, %v545
    %v552 = vunpack.c.l.b16 %v536
    %v553 = vunpack.c.l.b16 %v537
    %v554 = vunpack.c.l.b16 %v538
    %v555 = vunpack.c.l.b16 %v539
    %v556 = vpack.c.b16 %v553, %v552
    %v557 = vpack.c.b16 %v555, %v554
    %560 = vmatprep.subr.bf16.mxu0 0
    %561 = vmatpush1.bf16.msra.mxu0 %v556
    %562 = vmatprep.subr.bf16.mxu0 0
    %563 = vmatpush1.bf16.msra.mxu0 %v557
    %564 = vmatprep.subr.bf16.mxu0 0
    %565 = vmatpush1.bf16.msra.mxu0 0
    %566 = vmatprep.subr.bf16.mxu0 0
    %567 = vmatpush1.bf16.msra.mxu0 0
    %568 = vmatprep.subr.bf16.mxu0 0
    %569 = vmatpush1.bf16.msra.mxu0 0
    %570 = vmatprep.subr.bf16.mxu0 0
    %571 = vmatpush1.bf16.msra.mxu0 0
    %572 = vmatprep.subr.bf16.mxu0 0
    %573 = vmatpush1.bf16.msra.mxu0 0
    %574 = vmatprep.subr.bf16.mxu0 0
    %575 = vmatpush1.bf16.msra.mxu0 0
    %576 = vmatprep.subr.bf16.mxu0 0
    %577 = vmatpush1.bf16.msra.mxu0 0
    %578 = vmatprep.subr.bf16.mxu0 0
    %579 = vmatpush1.bf16.msra.mxu0 0
    %580 = vmatprep.subr.bf16.mxu0 0
    %581 = vmatpush1.bf16.msra.mxu0 0
    %582 = vmatprep.subr.bf16.mxu0 0
    %583 = vmatpush1.bf16.msra.mxu0 0
    %584 = vmatprep.subr.bf16.mxu0 0
    %585 = vmatpush1.bf16.msra.mxu0 0
    %586 = vmatprep.subr.bf16.mxu0 0
    %587 = vmatpush1.bf16.msra.mxu0 0
    %588 = vmatprep.subr.bf16.mxu0 0
    %589 = vmatpush1.bf16.msra.mxu0 0
    %590 = vmatprep.subr.bf16.mxu0 0
    %591 = vmatpush1.bf16.msra.mxu0 0
    %592 = vmatprep.mubr.bf16.mxu0 0
    %593 = vmatmul.mubr.bf16.gmra.mrb[0].mxu0 %v284
    %v594 = vpop.f32.mrb[0].mxu0
    %v595 = vadd.f32 %v546, %v594
    %v596 = vpop.f32.mrb[0].mxu0
    %v597 = vpop.f32.mrb[0].mxu0
    %v598 = vpop.f32.mrb[0].mxu0
    %599 = vdwg.mxu0
    %v600 = vmul.f32 %v332, %v595
    %v601 = vadd.f32 %v530, %v600
    %v602 = vtanh.pop %v601
    %v603 = vsub.f32 1.0, %v469
    %v604 = vmul.f32 %v603, %v602
    %v605 = vmul.f32 %v469, %v191
    %v606 = vadd.f32 %v604, %v605
    %s607 = scalar_lea.vmem %s2, 2
    %v608 = vld [vmem:[%s607] sm:$0x3]
    %v609 = vpack.c.bf16 %v608, %v608
    %s610 = scalar_lea.vmem %s3, 48
    %v611 = vld [vmem:[%s610] sm:$0xf]
    %v612 = vld [vmem:[%s610 + $0x4] sm:$0xf]
    %v613 = vld [vmem:[%s610 + $0x8] sm:$0xf]
    %v614 = vld [vmem:[%s610 + $0xc] sm:$0xf]
    %s615 = scalar_lea.vmem %s5, 3
    %v616 = vld [vmem:[%s615] sm:$0x1]
    %v618 = vlaneseq
    %v619 = vshrl.u32 %v618, 7
    %v620 = vsub.s32 0, %v619
    %v621 = vrot.slane %v616, %v620
    %v627 = vunpack.c.l.b16 %v611
    %v628 = vunpack.c.l.b16 %v612
    %v629 = vunpack.c.l.b16 %v613
    %v630 = vunpack.c.l.b16 %v614
    %v631 = vpack.c.b16 %v628, %v627
    %v632 = vpack.c.b16 %v630, %v629
    %635 = vmatprep.subr.bf16.mxu0 0
    %636 = vmatpush1.bf16.msra.mxu0 %v631
    %637 = vmatprep.subr.bf16.mxu0 0
    %638 = vmatpush1.bf16.msra.mxu0 %v632
    %639 = vmatprep.subr.bf16.mxu0 0
    %640 = vmatpush1.bf16.msra.mxu0 0
    %641 = vmatprep.subr.bf16.mxu0 0
    %642 = vmatpush1.bf16.msra.mxu0 0
    %643 = vmatprep.subr.bf16.mxu0 0
    %644 = vmatpush1.bf16.msra.mxu0 0
    %645 = vmatprep.subr.bf16.mxu0 0
    %646 = vmatpush1.bf16.msra.mxu0 0
    %647 = vmatprep.subr.bf16.mxu0 0
    %648 = vmatpush1.bf16.msra.mxu0 0
    %649 = vmatprep.subr.bf16.mxu0 0
    %650 = vmatpush1.bf16.msra.mxu0 0
    %651 = vmatprep.subr.bf16.mxu0 0
    %652 = vmatpush1.bf16.msra.mxu0 0
    %653 = vmatprep.subr.bf16.mxu0 0
    %654 = vmatpush1.bf16.msra.mxu0 0
    %655 = vmatprep.subr.bf16.mxu0 0
    %656 = vmatpush1.bf16.msra.mxu0 0
    %657 = vmatprep.subr.bf16.mxu0 0
    %658 = vmatpush1.bf16.msra.mxu0 0
    %659 = vmatprep.subr.bf16.mxu0 0
    %660 = vmatpush1.bf16.msra.mxu0 0
    %661 = vmatprep.subr.bf16.mxu0 0
    %662 = vmatpush1.bf16.msra.mxu0 0
    %663 = vmatprep.subr.bf16.mxu0 0
    %664 = vmatpush1.bf16.msra.mxu0 0
    %665 = vmatprep.subr.bf16.mxu0 0
    %666 = vmatpush1.bf16.msra.mxu0 0
    %667 = vmatprep.mubr.bf16.mxu0 0
    %668 = vmatmul.mubr.bf16.gmra.mrb[0].mxu0 %v218
    %v669 = vpop.f32.mrb[0].mxu0
    %v670 = vadd.f32 %v621, %v669
    %v671 = vpop.f32.mrb[0].mxu0
    %v672 = vpop.f32.mrb[0].mxu0
    %v673 = vpop.f32.mrb[0].mxu0
    %674 = vdwg.mxu0
    %s675 = scalar_lea.vmem %s4, 48
    %v676 = vld [vmem:[%s675] sm:$0xf]
    %v677 = vld [vmem:[%s675 + $0x4] sm:$0xf]
    %v678 = vld [vmem:[%s675 + $0x8] sm:$0xf]
    %v679 = vld [vmem:[%s675 + $0xc] sm:$0xf]
    %s680 = scalar_lea.vmem %s6, 3
    %v681 = vld [vmem:[%s680] sm:$0x1]
    %v683 = vlaneseq
    %v684 = vshrl.u32 %v683, 7
    %v685 = vsub.s32 0, %v684
    %v686 = vrot.slane %v681, %v685
    %v692 = vunpack.c.l.b16 %v676
    %v693 = vunpack.c.l.b16 %v677
    %v694 = vunpack.c.l.b16 %v678
    %v695 = vunpack.c.l.b16 %v679
    %v696 = vpack.c.b16 %v693, %v692
    %v697 = vpack.c.b16 %v695, %v694
    %v701 = vsel %vm216, %v609, 0
    %703 = vmatprep.subr.bf16.mxu0 0
    %704 = vmatpush1.bf16.msra.mxu0 %v696
    %705 = vmatprep.subr.bf16.mxu0 0
    %706 = vmatpush1.bf16.msra.mxu0 %v697
    %707 = vmatprep.subr.bf16.mxu0 0
    %708 = vmatpush1.bf16.msra.mxu0 0
    %709 = vmatprep.subr.bf16.mxu0 0
    %710 = vmatpush1.bf16.msra.mxu0 0
    %711 = vmatprep.subr.bf16.mxu0 0
    %712 = vmatpush1.bf16.msra.mxu0 0
    %713 = vmatprep.subr.bf16.mxu0 0
    %714 = vmatpush1.bf16.msra.mxu0 0
    %715 = vmatprep.subr.bf16.mxu0 0
    %716 = vmatpush1.bf16.msra.mxu0 0
    %717 = vmatprep.subr.bf16.mxu0 0
    %718 = vmatpush1.bf16.msra.mxu0 0
    %719 = vmatprep.subr.bf16.mxu0 0
    %720 = vmatpush1.bf16.msra.mxu0 0
    %721 = vmatprep.subr.bf16.mxu0 0
    %722 = vmatpush1.bf16.msra.mxu0 0
    %723 = vmatprep.subr.bf16.mxu0 0
    %724 = vmatpush1.bf16.msra.mxu0 0
    %725 = vmatprep.subr.bf16.mxu0 0
    %726 = vmatpush1.bf16.msra.mxu0 0
    %727 = vmatprep.subr.bf16.mxu0 0
    %728 = vmatpush1.bf16.msra.mxu0 0
    %729 = vmatprep.subr.bf16.mxu0 0
    %730 = vmatpush1.bf16.msra.mxu0 0
    %731 = vmatprep.subr.bf16.mxu0 0
    %732 = vmatpush1.bf16.msra.mxu0 0
    %733 = vmatprep.subr.bf16.mxu0 0
    %734 = vmatpush1.bf16.msra.mxu0 0
    %735 = vmatprep.mubr.bf16.mxu0 0
    %736 = vmatmul.mubr.bf16.gmra.mrb[0].mxu0 %v701
    %v737 = vpop.f32.mrb[0].mxu0
    %v738 = vadd.f32 %v686, %v737
    %v739 = vpop.f32.mrb[0].mxu0
    %v740 = vpop.f32.mrb[0].mxu0
    %v741 = vpop.f32.mrb[0].mxu0
    %742 = vdwg.mxu0
    %v743 = vadd.f32 %v670, %v738
    %v744 = vxor.u32 %v743, 2147483648
    %v745 = vmul.f32 %v744, 1.442695
    %v746 = vpow.pop %v745
    %v747 = vadd.f32 %v746, 1.0
    %v748 = vrcp.pop %v747
    %v749 = vmul.f32 1.0, %v748
    %s750 = scalar_lea.vmem %s3, 64
    %v751 = vld [vmem:[%s750] sm:$0xf]
    %v752 = vld [vmem:[%s750 + $0x4] sm:$0xf]
    %v753 = vld [vmem:[%s750 + $0x8] sm:$0xf]
    %v754 = vld [vmem:[%s750 + $0xc] sm:$0xf]
    %s755 = scalar_lea.vmem %s5, 4
    %v756 = vld [vmem:[%s755] sm:$0x1]
    %v758 = vlaneseq
    %v759 = vshrl.u32 %v758, 7
    %v760 = vsub.s32 0, %v759
    %v761 = vrot.slane %v756, %v760
    %v767 = vunpack.c.l.b16 %v751
    %v768 = vunpack.c.l.b16 %v752
    %v769 = vunpack.c.l.b16 %v753
    %v770 = vunpack.c.l.b16 %v754
    %v771 = vpack.c.b16 %v768, %v767
    %v772 = vpack.c.b16 %v770, %v769
    %775 = vmatprep.subr.bf16.mxu0 0
    %776 = vmatpush1.bf16.msra.mxu0 %v771
    %777 = vmatprep.subr.bf16.mxu0 0
    %778 = vmatpush1.bf16.msra.mxu0 %v772
    %779 = vmatprep.subr.bf16.mxu0 0
    %780 = vmatpush1.bf16.msra.mxu0 0
    %781 = vmatprep.subr.bf16.mxu0 0
    %782 = vmatpush1.bf16.msra.mxu0 0
    %783 = vmatprep.subr.bf16.mxu0 0
    %784 = vmatpush1.bf16.msra.mxu0 0
    %785 = vmatprep.subr.bf16.mxu0 0
    %786 = vmatpush1.bf16.msra.mxu0 0
    %787 = vmatprep.subr.bf16.mxu0 0
    %788 = vmatpush1.bf16.msra.mxu0 0
    %789 = vmatprep.subr.bf16.mxu0 0
    %790 = vmatpush1.bf16.msra.mxu0 0
    %791 = vmatprep.subr.bf16.mxu0 0
    %792 = vmatpush1.bf16.msra.mxu0 0
    %793 = vmatprep.subr.bf16.mxu0 0
    %794 = vmatpush1.bf16.msra.mxu0 0
    %795 = vmatprep.subr.bf16.mxu0 0
    %796 = vmatpush1.bf16.msra.mxu0 0
    %797 = vmatprep.subr.bf16.mxu0 0
    %798 = vmatpush1.bf16.msra.mxu0 0
    %799 = vmatprep.subr.bf16.mxu0 0
    %800 = vmatpush1.bf16.msra.mxu0 0
    %801 = vmatprep.subr.bf16.mxu0 0
    %802 = vmatpush1.bf16.msra.mxu0 0
    %803 = vmatprep.subr.bf16.mxu0 0
    %804 = vmatpush1.bf16.msra.mxu0 0
    %805 = vmatprep.subr.bf16.mxu0 0
    %806 = vmatpush1.bf16.msra.mxu0 0
    %807 = vmatprep.mubr.bf16.mxu0 0
    %808 = vmatmul.mubr.bf16.gmra.mrb[0].mxu0 %v218
    %v809 = vpop.f32.mrb[0].mxu0
    %v810 = vadd.f32 %v761, %v809
    %v811 = vpop.f32.mrb[0].mxu0
    %v812 = vpop.f32.mrb[0].mxu0
    %v813 = vpop.f32.mrb[0].mxu0
    %814 = vdwg.mxu0
    %s815 = scalar_lea.vmem %s4, 64
    %v816 = vld [vmem:[%s815] sm:$0xf]
    %v817 = vld [vmem:[%s815 + $0x4] sm:$0xf]
    %v818 = vld [vmem:[%s815 + $0x8] sm:$0xf]
    %v819 = vld [vmem:[%s815 + $0xc] sm:$0xf]
    %s820 = scalar_lea.vmem %s6, 4
    %v821 = vld [vmem:[%s820] sm:$0x1]
    %v823 = vlaneseq
    %v824 = vshrl.u32 %v823, 7
    %v825 = vsub.s32 0, %v824
    %v826 = vrot.slane %v821, %v825
    %v832 = vunpack.c.l.b16 %v816
    %v833 = vunpack.c.l.b16 %v817
    %v834 = vunpack.c.l.b16 %v818
    %v835 = vunpack.c.l.b16 %v819
    %v836 = vpack.c.b16 %v833, %v832
    %v837 = vpack.c.b16 %v835, %v834
    %840 = vmatprep.subr.bf16.mxu0 0
    %841 = vmatpush1.bf16.msra.mxu0 %v836
    %842 = vmatprep.subr.bf16.mxu0 0
    %843 = vmatpush1.bf16.msra.mxu0 %v837
    %844 = vmatprep.subr.bf16.mxu0 0
    %845 = vmatpush1.bf16.msra.mxu0 0
    %846 = vmatprep.subr.bf16.mxu0 0
    %847 = vmatpush1.bf16.msra.mxu0 0
    %848 = vmatprep.subr.bf16.mxu0 0
    %849 = vmatpush1.bf16.msra.mxu0 0
    %850 = vmatprep.subr.bf16.mxu0 0
    %851 = vmatpush1.bf16.msra.mxu0 0
    %852 = vmatprep.subr.bf16.mxu0 0
    %853 = vmatpush1.bf16.msra.mxu0 0
    %854 = vmatprep.subr.bf16.mxu0 0
    %855 = vmatpush1.bf16.msra.mxu0 0
    %856 = vmatprep.subr.bf16.mxu0 0
    %857 = vmatpush1.bf16.msra.mxu0 0
    %858 = vmatprep.subr.bf16.mxu0 0
    %859 = vmatpush1.bf16.msra.mxu0 0
    %860 = vmatprep.subr.bf16.mxu0 0
    %861 = vmatpush1.bf16.msra.mxu0 0
    %862 = vmatprep.subr.bf16.mxu0 0
    %863 = vmatpush1.bf16.msra.mxu0 0
    %864 = vmatprep.subr.bf16.mxu0 0
    %865 = vmatpush1.bf16.msra.mxu0 0
    %866 = vmatprep.subr.bf16.mxu0 0
    %867 = vmatpush1.bf16.msra.mxu0 0
    %868 = vmatprep.subr.bf16.mxu0 0
    %869 = vmatpush1.bf16.msra.mxu0 0
    %870 = vmatprep.subr.bf16.mxu0 0
    %871 = vmatpush1.bf16.msra.mxu0 0
    %872 = vmatprep.mubr.bf16.mxu0 0
    %873 = vmatmul.mubr.bf16.gmra.mrb[0].mxu0 %v701
    %v874 = vpop.f32.mrb[0].mxu0
    %v875 = vadd.f32 %v826, %v874
    %v876 = vpop.f32.mrb[0].mxu0
    %v877 = vpop.f32.mrb[0].mxu0
    %v878 = vpop.f32.mrb[0].mxu0
    %879 = vdwg.mxu0
    %v880 = vadd.f32 %v810, %v875
    %v881 = vxor.u32 %v880, 2147483648
    %v882 = vmul.f32 %v881, 1.442695
    %v883 = vpow.pop %v882
    %v884 = vadd.f32 %v883, 1.0
    %v885 = vrcp.pop %v884
    %v886 = vmul.f32 1.0, %v885
    %s887 = scalar_lea.vmem %s3, 80
    %v888 = vld [vmem:[%s887] sm:$0xf]
    %v889 = vld [vmem:[%s887 + $0x4] sm:$0xf]
    %v890 = vld [vmem:[%s887 + $0x8] sm:$0xf]
    %v891 = vld [vmem:[%s887 + $0xc] sm:$0xf]
    %s892 = scalar_lea.vmem %s5, 5
    %v893 = vld [vmem:[%s892] sm:$0x1]
    %v895 = vlaneseq
    %v896 = vshrl.u32 %v895, 7
    %v897 = vsub.s32 0, %v896
    %v898 = vrot.slane %v893, %v897
    %v904 = vunpack.c.l.b16 %v888
    %v905 = vunpack.c.l.b16 %v889
    %v906 = vunpack.c.l.b16 %v890
    %v907 = vunpack.c.l.b16 %v891
    %v908 = vpack.c.b16 %v905, %v904
    %v909 = vpack.c.b16 %v907, %v906
    %912 = vmatprep.subr.bf16.mxu0 0
    %913 = vmatpush1.bf16.msra.mxu0 %v908
    %914 = vmatprep.subr.bf16.mxu0 0
    %915 = vmatpush1.bf16.msra.mxu0 %v909
    %916 = vmatprep.subr.bf16.mxu0 0
    %917 = vmatpush1.bf16.msra.mxu0 0
    %918 = vmatprep.subr.bf16.mxu0 0
    %919 = vmatpush1.bf16.msra.mxu0 0
    %920 = vmatprep.subr.bf16.mxu0 0
    %921 = vmatpush1.bf16.msra.mxu0 0
    %922 = vmatprep.subr.bf16.mxu0 0
    %923 = vmatpush1.bf16.msra.mxu0 0
    %924 = vmatprep.subr.bf16.mxu0 0
    %925 = vmatpush1.bf16.msra.mxu0 0
    %926 = vmatprep.subr.bf16.mxu0 0
    %927 = vmatpush1.bf16.msra.mxu0 0
    %928 = vmatprep.subr.bf16.mxu0 0
    %929 = vmatpush1.bf16.msra.mxu0 0
    %930 = vmatprep.subr.bf16.mxu0 0
    %931 = vmatpush1.bf16.msra.mxu0 0
    %932 = vmatprep.subr.bf16.mxu0 0
    %933 = vmatpush1.bf16.msra.mxu0 0
    %934 = vmatprep.subr.bf16.mxu0 0
    %935 = vmatpush1.bf16.msra.mxu0 0
    %936 = vmatprep.subr.bf16.mxu0 0
    %937 = vmatpush1.bf16.msra.mxu0 0
    %938 = vmatprep.subr.bf16.mxu0 0
    %939 = vmatpush1.bf16.msra.mxu0 0
    %940 = vmatprep.subr.bf16.mxu0 0
    %941 = vmatpush1.bf16.msra.mxu0 0
    %942 = vmatprep.subr.bf16.mxu0 0
    %943 = vmatpush1.bf16.msra.mxu0 0
    %944 = vmatprep.mubr.bf16.mxu0 0
    %945 = vmatmul.mubr.bf16.gmra.mrb[0].mxu0 %v218
    %v946 = vpop.f32.mrb[0].mxu0
    %v947 = vadd.f32 %v898, %v946
    %v948 = vpop.f32.mrb[0].mxu0
    %v949 = vpop.f32.mrb[0].mxu0
    %v950 = vpop.f32.mrb[0].mxu0
    %951 = vdwg.mxu0
    %s952 = scalar_lea.vmem %s4, 80
    %v953 = vld [vmem:[%s952] sm:$0xf]
    %v954 = vld [vmem:[%s952 + $0x4] sm:$0xf]
    %v955 = vld [vmem:[%s952 + $0x8] sm:$0xf]
    %v956 = vld [vmem:[%s952 + $0xc] sm:$0xf]
    %s957 = scalar_lea.vmem %s6, 5
    %v958 = vld [vmem:[%s957] sm:$0x1]
    %v960 = vlaneseq
    %v961 = vshrl.u32 %v960, 7
    %v962 = vsub.s32 0, %v961
    %v963 = vrot.slane %v958, %v962
    %v969 = vunpack.c.l.b16 %v953
    %v970 = vunpack.c.l.b16 %v954
    %v971 = vunpack.c.l.b16 %v955
    %v972 = vunpack.c.l.b16 %v956
    %v973 = vpack.c.b16 %v970, %v969
    %v974 = vpack.c.b16 %v972, %v971
    %977 = vmatprep.subr.bf16.mxu0 0
    %978 = vmatpush1.bf16.msra.mxu0 %v973
    %979 = vmatprep.subr.bf16.mxu0 0
    %980 = vmatpush1.bf16.msra.mxu0 %v974
    %981 = vmatprep.subr.bf16.mxu0 0
    %982 = vmatpush1.bf16.msra.mxu0 0
    %983 = vmatprep.subr.bf16.mxu0 0
    %984 = vmatpush1.bf16.msra.mxu0 0
    %985 = vmatprep.subr.bf16.mxu0 0
    %986 = vmatpush1.bf16.msra.mxu0 0
    %987 = vmatprep.subr.bf16.mxu0 0
    %988 = vmatpush1.bf16.msra.mxu0 0
    %989 = vmatprep.subr.bf16.mxu0 0
    %990 = vmatpush1.bf16.msra.mxu0 0
    %991 = vmatprep.subr.bf16.mxu0 0
    %992 = vmatpush1.bf16.msra.mxu0 0
    %993 = vmatprep.subr.bf16.mxu0 0
    %994 = vmatpush1.bf16.msra.mxu0 0
    %995 = vmatprep.subr.bf16.mxu0 0
    %996 = vmatpush1.bf16.msra.mxu0 0
    %997 = vmatprep.subr.bf16.mxu0 0
    %998 = vmatpush1.bf16.msra.mxu0 0
    %999 = vmatprep.subr.bf16.mxu0 0
    %1000 = vmatpush1.bf16.msra.mxu0 0
    %1001 = vmatprep.subr.bf16.mxu0 0
    %1002 = vmatpush1.bf16.msra.mxu0 0
    %1003 = vmatprep.subr.bf16.mxu0 0
    %1004 = vmatpush1.bf16.msra.mxu0 0
    %1005 = vmatprep.subr.bf16.mxu0 0
    %1006 = vmatpush1.bf16.msra.mxu0 0
    %1007 = vmatprep.subr.bf16.mxu0 0
    %1008 = vmatpush1.bf16.msra.mxu0 0
    %1009 = vmatprep.mubr.bf16.mxu0 0
    %1010 = vmatmul.mubr.bf16.gmra.mrb[0].mxu0 %v701
    %v1011 = vpop.f32.mrb[0].mxu0
    %v1012 = vadd.f32 %v963, %v1011
    %v1013 = vpop.f32.mrb[0].mxu0
    %v1014 = vpop.f32.mrb[0].mxu0
    %v1015 = vpop.f32.mrb[0].mxu0
    %1016 = vdwg.mxu0
    %v1017 = vmul.f32 %v749, %v1012
    %v1018 = vadd.f32 %v947, %v1017
    %v1019 = vtanh.pop %v1018
    %v1020 = vsub.f32 1.0, %v886
    %v1021 = vmul.f32 %v1020, %v1019
    %v1022 = vmul.f32 %v886, %v608
    %v1023 = vadd.f32 %v1021, %v1022
    %1025 = vrot.lane.b32.xlu0 %v1023, 32
    %v1026 = vpop.permute.xlu0 %1025
    %v1028 = vsel %vm216, %v606, %v1026
    %v1029 = vpack.c.bf16 %v1028, %v1028
    %s1030 = scalar_lea.vmem %s2, 4
    %v1031 = vld [vmem:[%s1030] sm:$0x3]
    %v1032 = vpack.c.bf16 %v1031, %v1031
    %v1033 = vld [vmem:[%s7] sm:$0xf]
    %v1034 = vld [vmem:[%s7 + $0x4] sm:$0xf]
    %v1035 = vld [vmem:[%s7 + $0x8] sm:$0xf]
    %v1036 = vld [vmem:[%s7 + $0xc] sm:$0xf]
    %v1037 = vld [vmem:[%s7 + $0x10] sm:$0xf]
    %v1038 = vld [vmem:[%s7 + $0x14] sm:$0xf]
    %v1039 = vld [vmem:[%s7 + $0x18] sm:$0xf]
    %v1040 = vld [vmem:[%s7 + $0x1c] sm:$0xf]
    %v1041 = vld [vmem:[%s9] sm:$0x1]
    %v1043 = vlaneseq
    %v1044 = vshrl.u32 %v1043, 7
    %v1045 = vsub.s32 0, %v1044
    %v1046 = vrot.slane %v1041, %v1045
    %v1056 = vunpack.c.l.b16 %v1033
    %v1057 = vunpack.c.l.b16 %v1034
    %v1058 = vunpack.c.l.b16 %v1035
    %v1059 = vunpack.c.l.b16 %v1036
    %v1060 = vunpack.c.l.b16 %v1037
    %v1061 = vunpack.c.l.b16 %v1038
    %v1062 = vunpack.c.l.b16 %v1039
    %v1063 = vunpack.c.l.b16 %v1040
    %v1064 = vpack.c.b16 %v1057, %v1056
    %v1065 = vpack.c.b16 %v1059, %v1058
    %v1066 = vpack.c.b16 %v1061, %v1060
    %v1067 = vpack.c.b16 %v1063, %v1062
    %vm1072 = vcmask 523264
    %v1074 = vsel %vm1072, %v1029, 0
    %1076 = vmatprep.subr.bf16.mxu0 0
    %1077 = vmatpush1.bf16.msra.mxu0 %v1064
    %1078 = vmatprep.subr.bf16.mxu0 0
    %1079 = vmatpush1.bf16.msra.mxu0 %v1065
    %1080 = vmatprep.subr.bf16.mxu0 0
    %1081 = vmatpush1.bf16.msra.mxu0 %v1066
    %1082 = vmatprep.subr.bf16.mxu0 0
    %1083 = vmatpush1.bf16.msra.mxu0 %v1067
    %1084 = vmatprep.subr.bf16.mxu0 0
    %1085 = vmatpush1.bf16.msra.mxu0 0
    %1086 = vmatprep.subr.bf16.mxu0 0
    %1087 = vmatpush1.bf16.msra.mxu0 0
    %1088 = vmatprep.subr.bf16.mxu0 0
    %1089 = vmatpush1.bf16.msra.mxu0 0
    %1090 = vmatprep.subr.bf16.mxu0 0
    %1091 = vmatpush1.bf16.msra.mxu0 0
    %1092 = vmatprep.subr.bf16.mxu0 0
    %1093 = vmatpush1.bf16.msra.mxu0 0
    %1094 = vmatprep.subr.bf16.mxu0 0
    %1095 = vmatpush1.bf16.msra.mxu0 0
    %1096 = vmatprep.subr.bf16.mxu0 0
    %1097 = vmatpush1.bf16.msra.mxu0 0
    %1098 = vmatprep.subr.bf16.mxu0 0
    %1099 = vmatpush1.bf16.msra.mxu0 0
    %1100 = vmatprep.subr.bf16.mxu0 0
    %1101 = vmatpush1.bf16.msra.mxu0 0
    %1102 = vmatprep.subr.bf16.mxu0 0
    %1103 = vmatpush1.bf16.msra.mxu0 0
    %1104 = vmatprep.subr.bf16.mxu0 0
    %1105 = vmatpush1.bf16.msra.mxu0 0
    %1106 = vmatprep.subr.bf16.mxu0 0
    %1107 = vmatpush1.bf16.msra.mxu0 0
    %1108 = vmatprep.mubr.bf16.mxu0 0
    %1109 = vmatmul.mubr.bf16.gmra.mrb[0].mxu0 %v1074
    %v1110 = vpop.f32.mrb[0].mxu0
    %v1111 = vadd.f32 %v1046, %v1110
    %v1112 = vpop.f32.mrb[0].mxu0
    %v1113 = vpop.f32.mrb[0].mxu0
    %v1114 = vpop.f32.mrb[0].mxu0
    %1115 = vdwg.mxu0
    %v1116 = vld [vmem:[%s8] sm:$0xf]
    %v1117 = vld [vmem:[%s8 + $0x4] sm:$0xf]
    %v1118 = vld [vmem:[%s8 + $0x8] sm:$0xf]
    %v1119 = vld [vmem:[%s8 + $0xc] sm:$0xf]
    %v1120 = vld [vmem:[#allocation2] sm:$0x1]
    %v1122 = vlaneseq
    %v1123 = vshrl.u32 %v1122, 7
    %v1124 = vsub.s32 0, %v1123
    %v1125 = vrot.slane %v1120, %v1124
    %v1131 = vunpack.c.l.b16 %v1116
    %v1132 = vunpack.c.l.b16 %v1117
    %v1133 = vunpack.c.l.b16 %v1118
    %v1134 = vunpack.c.l.b16 %v1119
    %v1135 = vpack.c.b16 %v1132, %v1131
    %v1136 = vpack.c.b16 %v1134, %v1133
    %v1140 = vsel %vm216, %v1032, 0
    %1142 = vmatprep.subr.bf16.mxu0 0
    %1143 = vmatpush1.bf16.msra.mxu0 %v1135
    %1144 = vmatprep.subr.bf16.mxu0 0
    %1145 = vmatpush1.bf16.msra.mxu0 %v1136
    %1146 = vmatprep.subr.bf16.mxu0 0
    %1147 = vmatpush1.bf16.msra.mxu0 0
    %1148 = vmatprep.subr.bf16.mxu0 0
    %1149 = vmatpush1.bf16.msra.mxu0 0
    %1150 = vmatprep.subr.bf16.mxu0 0
    %1151 = vmatpush1.bf16.msra.mxu0 0
    %1152 = vmatprep.subr.bf16.mxu0 0
    %1153 = vmatpush1.bf16.msra.mxu0 0
    %1154 = vmatprep.subr.bf16.mxu0 0
    %1155 = vmatpush1.bf16.msra.mxu0 0
    %1156 = vmatprep.subr.bf16.mxu0 0
    %1157 = vmatpush1.bf16.msra.mxu0 0
    %1158 = vmatprep.subr.bf16.mxu0 0
    %1159 = vmatpush1.bf16.msra.mxu0 0
    %1160 = vmatprep.subr.bf16.mxu0 0
    %1161 = vmatpush1.bf16.msra.mxu0 0
    %1162 = vmatprep.subr.bf16.mxu0 0
    %1163 = vmatpush1.bf16.msra.mxu0 0
    %1164 = vmatprep.subr.bf16.mxu0 0
    %1165 = vmatpush1.bf16.msra.mxu0 0
    %1166 = vmatprep.subr.bf16.mxu0 0
    %1167 = vmatpush1.bf16.msra.mxu0 0
    %1168 = vmatprep.subr.bf16.mxu0 0
    %1169 = vmatpush1.bf16.msra.mxu0 0
    %1170 = vmatprep.subr.bf16.mxu0 0
    %1171 = vmatpush1.bf16.msra.mxu0 0
    %1172 = vmatprep.subr.bf16.mxu0 0
    %1173 = vmatpush1.bf16.msra.mxu0 0
    %1174 = vmatprep.mubr.bf16.mxu0 0
    %1175 = vmatmul.mubr.bf16.gmra.mrb[0].mxu0 %v1140
    %v1176 = vpop.f32.mrb[0].mxu0
    %v1177 = vadd.f32 %v1125, %v1176
    %v1178 = vpop.f32.mrb[0].mxu0
    %v1179 = vpop.f32.mrb[0].mxu0
    %v1180 = vpop.f32.mrb[0].mxu0
    %1181 = vdwg.mxu0
    %v1182 = vadd.f32 %v1111, %v1177
    %v1183 = vxor.u32 %v1182, 2147483648
    %v1184 = vmul.f32 %v1183, 1.442695
    %v1185 = vpow.pop %v1184
    %v1186 = vadd.f32 %v1185, 1.0
    %v1187 = vrcp.pop %v1186
    %v1188 = vmul.f32 1.0, %v1187
    %s1189 = scalar_lea.vmem %s7, 32
    %v1190 = vld [vmem:[%s1189] sm:$0xf]
    %v1191 = vld [vmem:[%s1189 + $0x4] sm:$0xf]
    %v1192 = vld [vmem:[%s1189 + $0x8] sm:$0xf]
    %v1193 = vld [vmem:[%s1189 + $0xc] sm:$0xf]
    %v1194 = vld [vmem:[%s1189 + $0x10] sm:$0xf]
    %v1195 = vld [vmem:[%s1189 + $0x14] sm:$0xf]
    %v1196 = vld [vmem:[%s1189 + $0x18] sm:$0xf]
    %v1197 = vld [vmem:[%s1189 + $0x1c] sm:$0xf]
    %s1198 = scalar_lea.vmem %s9, 1
    %v1199 = vld [vmem:[%s1198] sm:$0x1]
    %v1201 = vlaneseq
    %v1202 = vshrl.u32 %v1201, 7
    %v1203 = vsub.s32 0, %v1202
    %v1204 = vrot.slane %v1199, %v1203
    %v1214 = vunpack.c.l.b16 %v1190
    %v1215 = vunpack.c.l.b16 %v1191
    %v1216 = vunpack.c.l.b16 %v1192
    %v1217 = vunpack.c.l.b16 %v1193
    %v1218 = vunpack.c.l.b16 %v1194
    %v1219 = vunpack.c.l.b16 %v1195
    %v1220 = vunpack.c.l.b16 %v1196
    %v1221 = vunpack.c.l.b16 %v1197
    %v1222 = vpack.c.b16 %v1215, %v1214
    %v1223 = vpack.c.b16 %v1217, %v1216
    %v1224 = vpack.c.b16 %v1219, %v1218
    %v1225 = vpack.c.b16 %v1221, %v1220
    %1230 = vmatprep.subr.bf16.mxu0 0
    %1231 = vmatpush1.bf16.msra.mxu0 %v1222
    %1232 = vmatprep.subr.bf16.mxu0 0
    %1233 = vmatpush1.bf16.msra.mxu0 %v1223
    %1234 = vmatprep.subr.bf16.mxu0 0
    %1235 = vmatpush1.bf16.msra.mxu0 %v1224
    %1236 = vmatprep.subr.bf16.mxu0 0
    %1237 = vmatpush1.bf16.msra.mxu0 %v1225
    %1238 = vmatprep.subr.bf16.mxu0 0
    %1239 = vmatpush1.bf16.msra.mxu0 0
    %1240 = vmatprep.subr.bf16.mxu0 0
    %1241 = vmatpush1.bf16.msra.mxu0 0
    %1242 = vmatprep.subr.bf16.mxu0 0
    %1243 = vmatpush1.bf16.msra.mxu0 0
    %1244 = vmatprep.subr.bf16.mxu0 0
    %1245 = vmatpush1.bf16.msra.mxu0 0
    %1246 = vmatprep.subr.bf16.mxu0 0
    %1247 = vmatpush1.bf16.msra.mxu0 0
    %1248 = vmatprep.subr.bf16.mxu0 0
    %1249 = vmatpush1.bf16.msra.mxu0 0
    %1250 = vmatprep.subr.bf16.mxu0 0
    %1251 = vmatpush1.bf16.msra.mxu0 0
    %1252 = vmatprep.subr.bf16.mxu0 0
    %1253 = vmatpush1.bf16.msra.mxu0 0
    %1254 = vmatprep.subr.bf16.mxu0 0
    %1255 = vmatpush1.bf16.msra.mxu0 0
    %1256 = vmatprep.subr.bf16.mxu0 0
    %1257 = vmatpush1.bf16.msra.mxu0 0
    %1258 = vmatprep.subr.bf16.mxu0 0
    %1259 = vmatpush1.bf16.msra.mxu0 0
    %1260 = vmatprep.subr.bf16.mxu0 0
    %1261 = vmatpush1.bf16.msra.mxu0 0
    %1262 = vmatprep.mubr.bf16.mxu0 0
    %1263 = vmatmul.mubr.bf16.gmra.mrb[0].mxu0 %v1074
    %v1264 = vpop.f32.mrb[0].mxu0
    %v1265 = vadd.f32 %v1204, %v1264
    %v1266 = vpop.f32.mrb[0].mxu0
    %v1267 = vpop.f32.mrb[0].mxu0
    %v1268 = vpop.f32.mrb[0].mxu0
    %1269 = vdwg.mxu0
    %s1270 = scalar_lea.vmem %s8, 16
    %v1271 = vld [vmem:[%s1270] sm:$0xf]
    %v1272 = vld [vmem:[%s1270 + $0x4] sm:$0xf]
    %v1273 = vld [vmem:[%s1270 + $0x8] sm:$0xf]
    %v1274 = vld [vmem:[%s1270 + $0xc] sm:$0xf]
    %s1275 = scalar_lea.vmem [#allocation2], 1
    %v1276 = vld [vmem:[%s1275] sm:$0x1]
    %v1278 = vlaneseq
    %v1279 = vshrl.u32 %v1278, 7
    %v1280 = vsub.s32 0, %v1279
    %v1281 = vrot.slane %v1276, %v1280
    %v1287 = vunpack.c.l.b16 %v1271
    %v1288 = vunpack.c.l.b16 %v1272
    %v1289 = vunpack.c.l.b16 %v1273
    %v1290 = vunpack.c.l.b16 %v1274
    %v1291 = vpack.c.b16 %v1288, %v1287
    %v1292 = vpack.c.b16 %v1290, %v1289
    %1295 = vmatprep.subr.bf16.mxu0 0
    %1296 = vmatpush1.bf16.msra.mxu0 %v1291
    %1297 = vmatprep.subr.bf16.mxu0 0
    %1298 = vmatpush1.bf16.msra.mxu0 %v1292
    %1299 = vmatprep.subr.bf16.mxu0 0
    %1300 = vmatpush1.bf16.msra.mxu0 0
    %1301 = vmatprep.subr.bf16.mxu0 0
    %1302 = vmatpush1.bf16.msra.mxu0 0
    %1303 = vmatprep.subr.bf16.mxu0 0
    %1304 = vmatpush1.bf16.msra.mxu0 0
    %1305 = vmatprep.subr.bf16.mxu0 0
    %1306 = vmatpush1.bf16.msra.mxu0 0
    %1307 = vmatprep.subr.bf16.mxu0 0
    %1308 = vmatpush1.bf16.msra.mxu0 0
    %1309 = vmatprep.subr.bf16.mxu0 0
    %1310 = vmatpush1.bf16.msra.mxu0 0
    %1311 = vmatprep.subr.bf16.mxu0 0
    %1312 = vmatpush1.bf16.msra.mxu0 0
    %1313 = vmatprep.subr.bf16.mxu0 0
    %1314 = vmatpush1.bf16.msra.mxu0 0
    %1315 = vmatprep.subr.bf16.mxu0 0
    %1316 = vmatpush1.bf16.msra.mxu0 0
    %1317 = vmatprep.subr.bf16.mxu0 0
    %1318 = vmatpush1.bf16.msra.mxu0 0
    %1319 = vmatprep.subr.bf16.mxu0 0
    %1320 = vmatpush1.bf16.msra.mxu0 0
    %1321 = vmatprep.subr.bf16.mxu0 0
    %1322 = vmatpush1.bf16.msra.mxu0 0
    %1323 = vmatprep.subr.bf16.mxu0 0
    %1324 = vmatpush1.bf16.msra.mxu0 0
    %1325 = vmatprep.subr.bf16.mxu0 0
    %1326 = vmatpush1.bf16.msra.mxu0 0
    %1327 = vmatprep.mubr.bf16.mxu0 0
    %1328 = vmatmul.mubr.bf16.gmra.mrb[0].mxu0 %v1140
    %v1329 = vpop.f32.mrb[0].mxu0
    %v1330 = vadd.f32 %v1281, %v1329
    %v1331 = vpop.f32.mrb[0].mxu0
    %v1332 = vpop.f32.mrb[0].mxu0
    %v1333 = vpop.f32.mrb[0].mxu0
    %1334 = vdwg.mxu0
    %v1335 = vadd.f32 %v1265, %v1330
    %v1336 = vxor.u32 %v1335, 2147483648
    %v1337 = vmul.f32 %v1336, 1.442695
    %v1338 = vpow.pop %v1337
    %v1339 = vadd.f32 %v1338, 1.0
    %v1340 = vrcp.pop %v1339
    %v1341 = vmul.f32 1.0, %v1340
    %s1342 = scalar_lea.vmem %s7, 64
    %v1343 = vld [vmem:[%s1342] sm:$0xf]
    %v1344 = vld [vmem:[%s1342 + $0x4] sm:$0xf]
    %v1345 = vld [vmem:[%s1342 + $0x8] sm:$0xf]
    %v1346 = vld [vmem:[%s1342 + $0xc] sm:$0xf]
    %v1347 = vld [vmem:[%s1342 + $0x10] sm:$0xf]
    %v1348 = vld [vmem:[%s1342 + $0x14] sm:$0xf]
    %v1349 = vld [vmem:[%s1342 + $0x18] sm:$0xf]
    %v1350 = vld [vmem:[%s1342 + $0x1c] sm:$0xf]
    %s1351 = scalar_lea.vmem %s9, 2
    %v1352 = vld [vmem:[%s1351] sm:$0x1]
    %v1354 = vlaneseq
    %v1355 = vshrl.u32 %v1354, 7
    %v1356 = vsub.s32 0, %v1355
    %v1357 = vrot.slane %v1352, %v1356
    %v1367 = vunpack.c.l.b16 %v1343
    %v1368 = vunpack.c.l.b16 %v1344
    %v1369 = vunpack.c.l.b16 %v1345
    %v1370 = vunpack.c.l.b16 %v1346
    %v1371 = vunpack.c.l.b16 %v1347
    %v1372 = vunpack.c.l.b16 %v1348
    %v1373 = vunpack.c.l.b16 %v1349
    %v1374 = vunpack.c.l.b16 %v1350
    %v1375 = vpack.c.b16 %v1368, %v1367
    %v1376 = vpack.c.b16 %v1370, %v1369
    %v1377 = vpack.c.b16 %v1372, %v1371
    %v1378 = vpack.c.b16 %v1374, %v1373
    %1383 = vmatprep.subr.bf16.mxu0 0
    %1384 = vmatpush1.bf16.msra.mxu0 %v1375
    %1385 = vmatprep.subr.bf16.mxu0 0
    %1386 = vmatpush1.bf16.msra.mxu0 %v1376
    %1387 = vmatprep.subr.bf16.mxu0 0
    %1388 = vmatpush1.bf16.msra.mxu0 %v1377
    %1389 = vmatprep.subr.bf16.mxu0 0
    %1390 = vmatpush1.bf16.msra.mxu0 %v1378
    %1391 = vmatprep.subr.bf16.mxu0 0
    %1392 = vmatpush1.bf16.msra.mxu0 0
    %1393 = vmatprep.subr.bf16.mxu0 0
    %1394 = vmatpush1.bf16.msra.mxu0 0
    %1395 = vmatprep.subr.bf16.mxu0 0
    %1396 = vmatpush1.bf16.msra.mxu0 0
    %1397 = vmatprep.subr.bf16.mxu0 0
    %1398 = vmatpush1.bf16.msra.mxu0 0
    %1399 = vmatprep.subr.bf16.mxu0 0
    %1400 = vmatpush1.bf16.msra.mxu0 0
    %1401 = vmatprep.subr.bf16.mxu0 0
    %1402 = vmatpush1.bf16.msra.mxu0 0
    %1403 = vmatprep.subr.bf16.mxu0 0
    %1404 = vmatpush1.bf16.msra.mxu0 0
    %1405 = vmatprep.subr.bf16.mxu0 0
    %1406 = vmatpush1.bf16.msra.mxu0 0
    %1407 = vmatprep.subr.bf16.mxu0 0
    %1408 = vmatpush1.bf16.msra.mxu0 0
    %1409 = vmatprep.subr.bf16.mxu0 0
    %1410 = vmatpush1.bf16.msra.mxu0 0
    %1411 = vmatprep.subr.bf16.mxu0 0
    %1412 = vmatpush1.bf16.msra.mxu0 0
    %1413 = vmatprep.subr.bf16.mxu0 0
    %1414 = vmatpush1.bf16.msra.mxu0 0
    %1415 = vmatprep.mubr.bf16.mxu0 0
    %1416 = vmatmul.mubr.bf16.gmra.mrb[0].mxu0 %v1074
    %v1417 = vpop.f32.mrb[0].mxu0
    %v1418 = vadd.f32 %v1357, %v1417
    %v1419 = vpop.f32.mrb[0].mxu0
    %v1420 = vpop.f32.mrb[0].mxu0
    %v1421 = vpop.f32.mrb[0].mxu0
    %1422 = vdwg.mxu0
    %s1423 = scalar_lea.vmem %s8, 32
    %v1424 = vld [vmem:[%s1423] sm:$0xf]
    %v1425 = vld [vmem:[%s1423 + $0x4] sm:$0xf]
    %v1426 = vld [vmem:[%s1423 + $0x8] sm:$0xf]
    %v1427 = vld [vmem:[%s1423 + $0xc] sm:$0xf]
    %s1428 = scalar_lea.vmem [#allocation2], 2
    %v1429 = vld [vmem:[%s1428] sm:$0x1]
    %v1431 = vlaneseq
    %v1432 = vshrl.u32 %v1431, 7
    %v1433 = vsub.s32 0, %v1432
    %v1434 = vrot.slane %v1429, %v1433
    %v1440 = vunpack.c.l.b16 %v1424
    %v1441 = vunpack.c.l.b16 %v1425
    %v1442 = vunpack.c.l.b16 %v1426
    %v1443 = vunpack.c.l.b16 %v1427
    %v1444 = vpack.c.b16 %v1441, %v1440
    %v1445 = vpack.c.b16 %v1443, %v1442
    %1448 = vmatprep.subr.bf16.mxu0 0
    %1449 = vmatpush1.bf16.msra.mxu0 %v1444
    %1450 = vmatprep.subr.bf16.mxu0 0
    %1451 = vmatpush1.bf16.msra.mxu0 %v1445
    %1452 = vmatprep.subr.bf16.mxu0 0
    %1453 = vmatpush1.bf16.msra.mxu0 0
    %1454 = vmatprep.subr.bf16.mxu0 0
    %1455 = vmatpush1.bf16.msra.mxu0 0
    %1456 = vmatprep.subr.bf16.mxu0 0
    %1457 = vmatpush1.bf16.msra.mxu0 0
    %1458 = vmatprep.subr.bf16.mxu0 0
    %1459 = vmatpush1.bf16.msra.mxu0 0
    %1460 = vmatprep.subr.bf16.mxu0 0
    %1461 = vmatpush1.bf16.msra.mxu0 0
    %1462 = vmatprep.subr.bf16.mxu0 0
    %1463 = vmatpush1.bf16.msra.mxu0 0
    %1464 = vmatprep.subr.bf16.mxu0 0
    %1465 = vmatpush1.bf16.msra.mxu0 0
    %1466 = vmatprep.subr.bf16.mxu0 0
    %1467 = vmatpush1.bf16.msra.mxu0 0
    %1468 = vmatprep.subr.bf16.mxu0 0
    %1469 = vmatpush1.bf16.msra.mxu0 0
    %1470 = vmatprep.subr.bf16.mxu0 0
    %1471 = vmatpush1.bf16.msra.mxu0 0
    %1472 = vmatprep.subr.bf16.mxu0 0
    %1473 = vmatpush1.bf16.msra.mxu0 0
    %1474 = vmatprep.subr.bf16.mxu0 0
    %1475 = vmatpush1.bf16.msra.mxu0 0
    %1476 = vmatprep.subr.bf16.mxu0 0
    %1477 = vmatpush1.bf16.msra.mxu0 0
    %1478 = vmatprep.subr.bf16.mxu0 0
    %1479 = vmatpush1.bf16.msra.mxu0 0
    %1480 = vmatprep.mubr.bf16.mxu0 0
    %1481 = vmatmul.mubr.bf16.gmra.mrb[0].mxu0 %v1140
    %v1482 = vpop.f32.mrb[0].mxu0
    %v1483 = vadd.f32 %v1434, %v1482
    %v1484 = vpop.f32.mrb[0].mxu0
    %v1485 = vpop.f32.mrb[0].mxu0
    %v1486 = vpop.f32.mrb[0].mxu0
    %1487 = vdwg.mxu0
    %v1488 = vmul.f32 %v1188, %v1483
    %v1489 = vadd.f32 %v1418, %v1488
    %v1490 = vtanh.pop %v1489
    %v1491 = vsub.f32 1.0, %v1341
    %v1492 = vmul.f32 %v1491, %v1490
    %v1493 = vmul.f32 %v1341, %v1031
    %v1494 = vadd.f32 %v1492, %v1493
    %s1495 = scalar_lea.vmem %s2, 6
    %v1496 = vld [vmem:[%s1495] sm:$0x3]
    %v1497 = vpack.c.bf16 %v1496, %v1496
    %s1498 = scalar_lea.vmem %s7, 96
    %v1499 = vld [vmem:[%s1498] sm:$0xf]
    %v1500 = vld [vmem:[%s1498 + $0x4] sm:$0xf]
    %v1501 = vld [vmem:[%s1498 + $0x8] sm:$0xf]
    %v1502 = vld [vmem:[%s1498 + $0xc] sm:$0xf]
    %v1503 = vld [vmem:[%s1498 + $0x10] sm:$0xf]
    %v1504 = vld [vmem:[%s1498 + $0x14] sm:$0xf]
    %v1505 = vld [vmem:[%s1498 + $0x18] sm:$0xf]
    %v1506 = vld [vmem:[%s1498 + $0x1c] sm:$0xf]
    %s1507 = scalar_lea.vmem %s9, 3
    %v1508 = vld [vmem:[%s1507] sm:$0x1]
    %v1510 = vlaneseq
    %v1511 = vshrl.u32 %v1510, 7
    %v1512 = vsub.s32 0, %v1511
    %v1513 = vrot.slane %v1508, %v1512
    %v1523 = vunpack.c.l.b16 %v1499
    %v1524 = vunpack.c.l.b16 %v1500
    %v1525 = vunpack.c.l.b16 %v1501
    %v1526 = vunpack.c.l.b16 %v1502
    %v1527 = vunpack.c.l.b16 %v1503
    %v1528 = vunpack.c.l.b16 %v1504
    %v1529 = vunpack.c.l.b16 %v1505
    %v1530 = vunpack.c.l.b16 %v1506
    %v1531 = vpack.c.b16 %v1524, %v1523
    %v1532 = vpack.c.b16 %v1526, %v1525
    %v1533 = vpack.c.b16 %v1528, %v1527
    %v1534 = vpack.c.b16 %v1530, %v1529
    %1539 = vmatprep.subr.bf16.mxu0 0
    %1540 = vmatpush1.bf16.msra.mxu0 %v1531
    %1541 = vmatprep.subr.bf16.mxu0 0
    %1542 = vmatpush1.bf16.msra.mxu0 %v1532
    %1543 = vmatprep.subr.bf16.mxu0 0
    %1544 = vmatpush1.bf16.msra.mxu0 %v1533
    %1545 = vmatprep.subr.bf16.mxu0 0
    %1546 = vmatpush1.bf16.msra.mxu0 %v1534
    %1547 = vmatprep.subr.bf16.mxu0 0
    %1548 = vmatpush1.bf16.msra.mxu0 0
    %1549 = vmatprep.subr.bf16.mxu0 0
    %1550 = vmatpush1.bf16.msra.mxu0 0
    %1551 = vmatprep.subr.bf16.mxu0 0
    %1552 = vmatpush1.bf16.msra.mxu0 0
    %1553 = vmatprep.subr.bf16.mxu0 0
    %1554 = vmatpush1.bf16.msra.mxu0 0
    %1555 = vmatprep.subr.bf16.mxu0 0
    %1556 = vmatpush1.bf16.msra.mxu0 0
    %1557 = vmatprep.subr.bf16.mxu0 0
    %1558 = vmatpush1.bf16.msra.mxu0 0
    %1559 = vmatprep.subr.bf16.mxu0 0
    %1560 = vmatpush1.bf16.msra.mxu0 0
    %1561 = vmatprep.subr.bf16.mxu0 0
    %1562 = vmatpush1.bf16.msra.mxu0 0
    %1563 = vmatprep.subr.bf16.mxu0 0
    %1564 = vmatpush1.bf16.msra.mxu0 0
    %1565 = vmatprep.subr.bf16.mxu0 0
    %1566 = vmatpush1.bf16.msra.mxu0 0
    %1567 = vmatprep.subr.bf16.mxu0 0
    %1568 = vmatpush1.bf16.msra.mxu0 0
    %1569 = vmatprep.subr.bf16.mxu0 0
    %1570 = vmatpush1.bf16.msra.mxu0 0
    %1571 = vmatprep.mubr.bf16.mxu0 0
    %1572 = vmatmul.mubr.bf16.gmra.mrb[0].mxu0 %v1074
    %v1573 = vpop.f32.mrb[0].mxu0
    %v1574 = vadd.f32 %v1513, %v1573
    %v1575 = vpop.f32.mrb[0].mxu0
    %v1576 = vpop.f32.mrb[0].mxu0
    %v1577 = vpop.f32.mrb[0].mxu0
    %1578 = vdwg.mxu0
    %s1579 = scalar_lea.vmem %s8, 48
    %v1580 = vld [vmem:[%s1579] sm:$0xf]
    %v1581 = vld [vmem:[%s1579 + $0x4] sm:$0xf]
    %v1582 = vld [vmem:[%s1579 + $0x8] sm:$0xf]
    %v1583 = vld [vmem:[%s1579 + $0xc] sm:$0xf]
    %s1584 = scalar_lea.vmem [#allocation2], 3
    %v1585 = vld [vmem:[%s1584] sm:$0x1]
    %v1587 = vlaneseq
    %v1588 = vshrl.u32 %v1587, 7
    %v1589 = vsub.s32 0, %v1588
    %v1590 = vrot.slane %v1585, %v1589
    %v1596 = vunpack.c.l.b16 %v1580
    %v1597 = vunpack.c.l.b16 %v1581
    %v1598 = vunpack.c.l.b16 %v1582
    %v1599 = vunpack.c.l.b16 %v1583
    %v1600 = vpack.c.b16 %v1597, %v1596
    %v1601 = vpack.c.b16 %v1599, %v1598
    %v1605 = vsel %vm216, %v1497, 0
    %1607 = vmatprep.subr.bf16.mxu0 0
    %1608 = vmatpush1.bf16.msra.mxu0 %v1600
    %1609 = vmatprep.subr.bf16.mxu0 0
    %1610 = vmatpush1.bf16.msra.mxu0 %v1601
    %1611 = vmatprep.subr.bf16.mxu0 0
    %1612 = vmatpush1.bf16.msra.mxu0 0
    %1613 = vmatprep.subr.bf16.mxu0 0
    %1614 = vmatpush1.bf16.msra.mxu0 0
    %1615 = vmatprep.subr.bf16.mxu0 0
    %1616 = vmatpush1.bf16.msra.mxu0 0
    %1617 = vmatprep.subr.bf16.mxu0 0
    %1618 = vmatpush1.bf16.msra.mxu0 0
    %1619 = vmatprep.subr.bf16.mxu0 0
    %1620 = vmatpush1.bf16.msra.mxu0 0
    %1621 = vmatprep.subr.bf16.mxu0 0
    %1622 = vmatpush1.bf16.msra.mxu0 0
    %1623 = vmatprep.subr.bf16.mxu0 0
    %1624 = vmatpush1.bf16.msra.mxu0 0
    %1625 = vmatprep.subr.bf16.mxu0 0
    %1626 = vmatpush1.bf16.msra.mxu0 0
    %1627 = vmatprep.subr.bf16.mxu0 0
    %1628 = vmatpush1.bf16.msra.mxu0 0
    %1629 = vmatprep.subr.bf16.mxu0 0
    %1630 = vmatpush1.bf16.msra.mxu0 0
    %1631 = vmatprep.subr.bf16.mxu0 0
    %1632 = vmatpush1.bf16.msra.mxu0 0
    %1633 = vmatprep.subr.bf16.mxu0 0
    %1634 = vmatpush1.bf16.msra.mxu0 0
    %1635 = vmatprep.subr.bf16.mxu0 0
    %1636 = vmatpush1.bf16.msra.mxu0 0
    %1637 = vmatprep.subr.bf16.mxu0 0
    %1638 = vmatpush1.bf16.msra.mxu0 0
    %1639 = vmatprep.mubr.bf16.mxu0 0
    %1640 = vmatmul.mubr.bf16.gmra.mrb[0].mxu0 %v1605
    %v1641 = vpop.f32.mrb[0].mxu0
    %v1642 = vadd.f32 %v1590, %v1641
    %v1643 = vpop.f32.mrb[0].mxu0
    %v1644 = vpop.f32.mrb[0].mxu0
    %v1645 = vpop.f32.mrb[0].mxu0
    %1646 = vdwg.mxu0
    %v1647 = vadd.f32 %v1574, %v1642
    %v1648 = vxor.u32 %v1647, 2147483648
    %v1649 = vmul.f32 %v1648, 1.442695
    %v1650 = vpow.pop %v1649
    %v1651 = vadd.f32 %v1650, 1.0
    %v1652 = vrcp.pop %v1651
    %v1653 = vmul.f32 1.0, %v1652
    %s1654 = scalar_lea.vmem %s7, 128
    %v1655 = vld [vmem:[%s1654] sm:$0xf]
    %v1656 = vld [vmem:[%s1654 + $0x4] sm:$0xf]
    %v1657 = vld [vmem:[%s1654 + $0x8] sm:$0xf]
    %v1658 = vld [vmem:[%s1654 + $0xc] sm:$0xf]
    %v1659 = vld [vmem:[%s1654 + $0x10] sm:$0xf]
    %v1660 = vld [vmem:[%s1654 + $0x14] sm:$0xf]
    %v1661 = vld [vmem:[%s1654 + $0x18] sm:$0xf]
    %v1662 = vld [vmem:[%s1654 + $0x1c] sm:$0xf]
    %s1663 = scalar_lea.vmem %s9, 4
    %v1664 = vld [vmem:[%s1663] sm:$0x1]
    %v1666 = vlaneseq
    %v1667 = vshrl.u32 %v1666, 7
    %v1668 = vsub.s32 0, %v1667
    %v1669 = vrot.slane %v1664, %v1668
    %v1679 = vunpack.c.l.b16 %v1655
    %v1680 = vunpack.c.l.b16 %v1656
    %v1681 = vunpack.c.l.b16 %v1657
    %v1682 = vunpack.c.l.b16 %v1658
    %v1683 = vunpack.c.l.b16 %v1659
    %v1684 = vunpack.c.l.b16 %v1660
    %v1685 = vunpack.c.l.b16 %v1661
    %v1686 = vunpack.c.l.b16 %v1662
    %v1687 = vpack.c.b16 %v1680, %v1679
    %v1688 = vpack.c.b16 %v1682, %v1681
    %v1689 = vpack.c.b16 %v1684, %v1683
    %v1690 = vpack.c.b16 %v1686, %v1685
    %1695 = vmatprep.subr.bf16.mxu0 0
    %1696 = vmatpush1.bf16.msra.mxu0 %v1687
    %1697 = vmatprep.subr.bf16.mxu0 0
    %1698 = vmatpush1.bf16.msra.mxu0 %v1688
    %1699 = vmatprep.subr.bf16.mxu0 0
    %1700 = vmatpush1.bf16.msra.mxu0 %v1689
    %1701 = vmatprep.subr.bf16.mxu0 0
    %1702 = vmatpush1.bf16.msra.mxu0 %v1690
    %1703 = vmatprep.subr.bf16.mxu0 0
    %1704 = vmatpush1.bf16.msra.mxu0 0
    %1705 = vmatprep.subr.bf16.mxu0 0
    %1706 = vmatpush1.bf16.msra.mxu0 0
    %1707 = vmatprep.subr.bf16.mxu0 0
    %1708 = vmatpush1.bf16.msra.mxu0 0
    %1709 = vmatprep.subr.bf16.mxu0 0
    %1710 = vmatpush1.bf16.msra.mxu0 0
    %1711 = vmatprep.subr.bf16.mxu0 0
    %1712 = vmatpush1.bf16.msra.mxu0 0
    %1713 = vmatprep.subr.bf16.mxu0 0
    %1714 = vmatpush1.bf16.msra.mxu0 0
    %1715 = vmatprep.subr.bf16.mxu0 0
    %1716 = vmatpush1.bf16.msra.mxu0 0
    %1717 = vmatprep.subr.bf16.mxu0 0
    %1718 = vmatpush1.bf16.msra.mxu0 0
    %1719 = vmatprep.subr.bf16.mxu0 0
    %1720 = vmatpush1.bf16.msra.mxu0 0
    %1721 = vmatprep.subr.bf16.mxu0 0
    %1722 = vmatpush1.bf16.msra.mxu0 0
    %1723 = vmatprep.subr.bf16.mxu0 0
    %1724 = vmatpush1.bf16.msra.mxu0 0
    %1725 = vmatprep.subr.bf16.mxu0 0
    %1726 = vmatpush1.bf16.msra.mxu0 0
    %1727 = vmatprep.mubr.bf16.mxu0 0
    %1728 = vmatmul.mubr.bf16.gmra.mrb[0].mxu0 %v1074
    %v1729 = vpop.f32.mrb[0].mxu0
    %v1730 = vadd.f32 %v1669, %v1729
    %v1731 = vpop.f32.mrb[0].mxu0
    %v1732 = vpop.f32.mrb[0].mxu0
    %v1733 = vpop.f32.mrb[0].mxu0
    %1734 = vdwg.mxu0
    %s1735 = scalar_lea.vmem %s8, 64
    %v1736 = vld [vmem:[%s1735] sm:$0xf]
    %v1737 = vld [vmem:[%s1735 + $0x4] sm:$0xf]
    %v1738 = vld [vmem:[%s1735 + $0x8] sm:$0xf]
    %v1739 = vld [vmem:[%s1735 + $0xc] sm:$0xf]
    %s1740 = scalar_lea.vmem [#allocation2], 4
    %v1741 = vld [vmem:[%s1740] sm:$0x1]
    %v1743 = vlaneseq
    %v1744 = vshrl.u32 %v1743, 7
    %v1745 = vsub.s32 0, %v1744
    %v1746 = vrot.slane %v1741, %v1745
    %v1752 = vunpack.c.l.b16 %v1736
    %v1753 = vunpack.c.l.b16 %v1737
    %v1754 = vunpack.c.l.b16 %v1738
    %v1755 = vunpack.c.l.b16 %v1739
    %v1756 = vpack.c.b16 %v1753, %v1752
    %v1757 = vpack.c.b16 %v1755, %v1754
    %1760 = vmatprep.subr.bf16.mxu0 0
    %1761 = vmatpush1.bf16.msra.mxu0 %v1756
    %1762 = vmatprep.subr.bf16.mxu0 0
    %1763 = vmatpush1.bf16.msra.mxu0 %v1757
    %1764 = vmatprep.subr.bf16.mxu0 0
    %1765 = vmatpush1.bf16.msra.mxu0 0
    %1766 = vmatprep.subr.bf16.mxu0 0
    %1767 = vmatpush1.bf16.msra.mxu0 0
    %1768 = vmatprep.subr.bf16.mxu0 0
    %1769 = vmatpush1.bf16.msra.mxu0 0
    %1770 = vmatprep.subr.bf16.mxu0 0
    %1771 = vmatpush1.bf16.msra.mxu0 0
    %1772 = vmatprep.subr.bf16.mxu0 0
    %1773 = vmatpush1.bf16.msra.mxu0 0
    %1774 = vmatprep.subr.bf16.mxu0 0
    %1775 = vmatpush1.bf16.msra.mxu0 0
    %1776 = vmatprep.subr.bf16.mxu0 0
    %1777 = vmatpush1.bf16.msra.mxu0 0
    %1778 = vmatprep.subr.bf16.mxu0 0
    %1779 = vmatpush1.bf16.msra.mxu0 0
    %1780 = vmatprep.subr.bf16.mxu0 0
    %1781 = vmatpush1.bf16.msra.mxu0 0
    %1782 = vmatprep.subr.bf16.mxu0 0
    %1783 = vmatpush1.bf16.msra.mxu0 0
    %1784 = vmatprep.subr.bf16.mxu0 0
    %1785 = vmatpush1.bf16.msra.mxu0 0
    %1786 = vmatprep.subr.bf16.mxu0 0
    %1787 = vmatpush1.bf16.msra.mxu0 0
    %1788 = vmatprep.subr.bf16.mxu0 0
    %1789 = vmatpush1.bf16.msra.mxu0 0
    %1790 = vmatprep.subr.bf16.mxu0 0
    %1791 = vmatpush1.bf16.msra.mxu0 0
    %1792 = vmatprep.mubr.bf16.mxu0 0
    %1793 = vmatmul.mubr.bf16.gmra.mrb[0].mxu0 %v1605
    %v1794 = vpop.f32.mrb[0].mxu0
    %v1795 = vadd.f32 %v1746, %v1794
    %v1796 = vpop.f32.mrb[0].mxu0
    %v1797 = vpop.f32.mrb[0].mxu0
    %v1798 = vpop.f32.mrb[0].mxu0
    %1799 = vdwg.mxu0
    %v1800 = vadd.f32 %v1730, %v1795
    %v1801 = vxor.u32 %v1800, 2147483648
    %v1802 = vmul.f32 %v1801, 1.442695
    %v1803 = vpow.pop %v1802
    %v1804 = vadd.f32 %v1803, 1.0
    %v1805 = vrcp.pop %v1804
    %v1806 = vmul.f32 1.0, %v1805
    %s1807 = scalar_lea.vmem %s7, 160
    %v1808 = vld [vmem:[%s1807] sm:$0xf]
    %v1809 = vld [vmem:[%s1807 + $0x4] sm:$0xf]
    %v1810 = vld [vmem:[%s1807 + $0x8] sm:$0xf]
    %v1811 = vld [vmem:[%s1807 + $0xc] sm:$0xf]
    %v1812 = vld [vmem:[%s1807 + $0x10] sm:$0xf]
    %v1813 = vld [vmem:[%s1807 + $0x14] sm:$0xf]
    %v1814 = vld [vmem:[%s1807 + $0x18] sm:$0xf]
    %v1815 = vld [vmem:[%s1807 + $0x1c] sm:$0xf]
    %s1816 = scalar_lea.vmem %s9, 5
    %v1817 = vld [vmem:[%s1816] sm:$0x1]
    %v1819 = vlaneseq
    %v1820 = vshrl.u32 %v1819, 7
    %v1821 = vsub.s32 0, %v1820
    %v1822 = vrot.slane %v1817, %v1821
    %v1832 = vunpack.c.l.b16 %v1808
    %v1833 = vunpack.c.l.b16 %v1809
    %v1834 = vunpack.c.l.b16 %v1810
    %v1835 = vunpack.c.l.b16 %v1811
    %v1836 = vunpack.c.l.b16 %v1812
    %v1837 = vunpack.c.l.b16 %v1813
    %v1838 = vunpack.c.l.b16 %v1814
    %v1839 = vunpack.c.l.b16 %v1815
    %v1840 = vpack.c.b16 %v1833, %v1832
    %v1841 = vpack.c.b16 %v1835, %v1834
    %v1842 = vpack.c.b16 %v1837, %v1836
    %v1843 = vpack.c.b16 %v1839, %v1838
    %1848 = vmatprep.subr.bf16.mxu0 0
    %1849 = vmatpush1.bf16.msra.mxu0 %v1840
    %1850 = vmatprep.subr.bf16.mxu0 0
    %1851 = vmatpush1.bf16.msra.mxu0 %v1841
    %1852 = vmatprep.subr.bf16.mxu0 0
    %1853 = vmatpush1.bf16.msra.mxu0 %v1842
    %1854 = vmatprep.subr.bf16.mxu0 0
    %1855 = vmatpush1.bf16.msra.mxu0 %v1843
    %1856 = vmatprep.subr.bf16.mxu0 0
    %1857 = vmatpush1.bf16.msra.mxu0 0
    %1858 = vmatprep.subr.bf16.mxu0 0
    %1859 = vmatpush1.bf16.msra.mxu0 0
    %1860 = vmatprep.subr.bf16.mxu0 0
    %1861 = vmatpush1.bf16.msra.mxu0 0
    %1862 = vmatprep.subr.bf16.mxu0 0
    %1863 = vmatpush1.bf16.msra.mxu0 0
    %1864 = vmatprep.subr.bf16.mxu0 0
    %1865 = vmatpush1.bf16.msra.mxu0 0
    %1866 = vmatprep.subr.bf16.mxu0 0
    %1867 = vmatpush1.bf16.msra.mxu0 0
    %1868 = vmatprep.subr.bf16.mxu0 0
    %1869 = vmatpush1.bf16.msra.mxu0 0
    %1870 = vmatprep.subr.bf16.mxu0 0
    %1871 = vmatpush1.bf16.msra.mxu0 0
    %1872 = vmatprep.subr.bf16.mxu0 0
    %1873 = vmatpush1.bf16.msra.mxu0 0
    %1874 = vmatprep.subr.bf16.mxu0 0
    %1875 = vmatpush1.bf16.msra.mxu0 0
    %1876 = vmatprep.subr.bf16.mxu0 0
    %1877 = vmatpush1.bf16.msra.mxu0 0
    %1878 = vmatprep.subr.bf16.mxu0 0
    %1879 = vmatpush1.bf16.msra.mxu0 0
    %1880 = vmatprep.mubr.bf16.mxu0 0
    %1881 = vmatmul.mubr.bf16.gmra.mrb[0].mxu0 %v1074
    %v1882 = vpop.f32.mrb[0].mxu0
    %v1883 = vadd.f32 %v1822, %v1882
    %v1884 = vpop.f32.mrb[0].mxu0
    %v1885 = vpop.f32.mrb[0].mxu0
    %v1886 = vpop.f32.mrb[0].mxu0
    %1887 = vdwg.mxu0
    %s1888 = scalar_lea.vmem %s8, 80
    %v1889 = vld [vmem:[%s1888] sm:$0xf]
    %v1890 = vld [vmem:[%s1888 + $0x4] sm:$0xf]
    %v1891 = vld [vmem:[%s1888 + $0x8] sm:$0xf]
    %v1892 = vld [vmem:[%s1888 + $0xc] sm:$0xf]
    %s1893 = scalar_lea.vmem [#allocation2], 5
    %v1894 = vld [vmem:[%s1893] sm:$0x1]
    %v1896 = vlaneseq
    %v1897 = vshrl.u32 %v1896, 7
    %v1898 = vsub.s32 0, %v1897
    %v1899 = vrot.slane %v1894, %v1898
    %v1905 = vunpack.c.l.b16 %v1889
    %v1906 = vunpack.c.l.b16 %v1890
    %v1907 = vunpack.c.l.b16 %v1891
    %v1908 = vunpack.c.l.b16 %v1892
    %v1909 = vpack.c.b16 %v1906, %v1905
    %v1910 = vpack.c.b16 %v1908, %v1907
    %1913 = vmatprep.subr.bf16.mxu0 0
    %1914 = vmatpush1.bf16.msra.mxu0 %v1909
    %1915 = vmatprep.subr.bf16.mxu0 0
    %1916 = vmatpush1.bf16.msra.mxu0 %v1910
    %1917 = vmatprep.subr.bf16.mxu0 0
    %1918 = vmatpush1.bf16.msra.mxu0 0
    %1919 = vmatprep.subr.bf16.mxu0 0
    %1920 = vmatpush1.bf16.msra.mxu0 0
    %1921 = vmatprep.subr.bf16.mxu0 0
    %1922 = vmatpush1.bf16.msra.mxu0 0
    %1923 = vmatprep.subr.bf16.mxu0 0
    %1924 = vmatpush1.bf16.msra.mxu0 0
    %1925 = vmatprep.subr.bf16.mxu0 0
    %1926 = vmatpush1.bf16.msra.mxu0 0
    %1927 = vmatprep.subr.bf16.mxu0 0
    %1928 = vmatpush1.bf16.msra.mxu0 0
    %1929 = vmatprep.subr.bf16.mxu0 0
    %1930 = vmatpush1.bf16.msra.mxu0 0
    %1931 = vmatprep.subr.bf16.mxu0 0
    %1932 = vmatpush1.bf16.msra.mxu0 0
    %1933 = vmatprep.subr.bf16.mxu0 0
    %1934 = vmatpush1.bf16.msra.mxu0 0
    %1935 = vmatprep.subr.bf16.mxu0 0
    %1936 = vmatpush1.bf16.msra.mxu0 0
    %1937 = vmatprep.subr.bf16.mxu0 0
    %1938 = vmatpush1.bf16.msra.mxu0 0
    %1939 = vmatprep.subr.bf16.mxu0 0
    %1940 = vmatpush1.bf16.msra.mxu0 0
    %1941 = vmatprep.subr.bf16.mxu0 0
    %1942 = vmatpush1.bf16.msra.mxu0 0
    %1943 = vmatprep.subr.bf16.mxu0 0
    %1944 = vmatpush1.bf16.msra.mxu0 0
    %1945 = vmatprep.mubr.bf16.mxu0 0
    %1946 = vmatmul.mubr.bf16.gmra.mrb[0].mxu0 %v1605
    %v1947 = vpop.f32.mrb[0].mxu0
    %v1948 = vadd.f32 %v1899, %v1947
    %v1949 = vpop.f32.mrb[0].mxu0
    %v1950 = vpop.f32.mrb[0].mxu0
    %v1951 = vpop.f32.mrb[0].mxu0
    %1952 = vdwg.mxu0
    %v1953 = vmul.f32 %v1653, %v1948
    %v1954 = vadd.f32 %v1883, %v1953
    %v1955 = vtanh.pop %v1954
    %v1956 = vsub.f32 1.0, %v1806
    %v1957 = vmul.f32 %v1956, %v1955
    %v1958 = vmul.f32 %v1806, %v1496
    %v1959 = vadd.f32 %v1957, %v1958
    %1961 = vrot.lane.b32.xlu0 %v1959, 32
    %v1962 = vpop.permute.xlu0 %1961
    %v1964 = vsel %vm216, %v1494, %v1962
    %v1965 = vpack.c.bf16 %v1964, %v1964
    %v1966 = vld [vmem:[#allocation5] sm:$0xf]
    %v1967 = vld [vmem:[#allocation5 + $0x4] sm:$0xf]
    %v1968 = vld [vmem:[#allocation5 + $0x8] sm:$0xf]
    %v1969 = vld [vmem:[#allocation5 + $0xc] sm:$0xf]
    %v1970 = vld [vmem:[#allocation5 + $0x10] sm:$0xf]
    %v1971 = vld [vmem:[#allocation5 + $0x14] sm:$0xf]
    %v1972 = vld [vmem:[#allocation5 + $0x18] sm:$0xf]
    %v1973 = vld [vmem:[#allocation5 + $0x1c] sm:$0xf]
    %v1974 = vld [vmem:[%s12] sm:$0x1]
    %v1976 = vlaneseq
    %v1977 = vshrl.u32 %v1976, 7
    %v1978 = vsub.s32 0, %v1977
    %v1979 = vrot.slane %v1974, %v1978
    %v1989 = vunpack.c.l.b16 %v1966
    %v1990 = vunpack.c.l.b16 %v1967
    %v1991 = vunpack.c.l.b16 %v1968
    %v1992 = vunpack.c.l.b16 %v1969
    %v1993 = vunpack.c.l.b16 %v1970
    %v1994 = vunpack.c.l.b16 %v1971
    %v1995 = vunpack.c.l.b16 %v1972
    %v1996 = vunpack.c.l.b16 %v1973
    %v1997 = vpack.c.b16 %v1990, %v1989
    %v1998 = vpack.c.b16 %v1992, %v1991
    %v1999 = vpack.c.b16 %v1994, %v1993
    %v2000 = vpack.c.b16 %v1996, %v1995
    %v2006 = vsel %vm1072, %v1965, 0
    %2008 = vmatprep.subr.bf16.mxu0 0
    %2009 = vmatpush1.bf16.msra.mxu0 %v1997
    %2010 = vmatprep.subr.bf16.mxu0 0
    %2011 = vmatpush1.bf16.msra.mxu0 %v1998
    %2012 = vmatprep.subr.bf16.mxu0 0
    %2013 = vmatpush1.bf16.msra.mxu0 %v1999
    %2014 = vmatprep.subr.bf16.mxu0 0
    %2015 = vmatpush1.bf16.msra.mxu0 %v2000
    %2016 = vmatprep.subr.bf16.mxu0 0
    %2017 = vmatpush1.bf16.msra.mxu0 0
    %2018 = vmatprep.subr.bf16.mxu0 0
    %2019 = vmatpush1.bf16.msra.mxu0 0
    %2020 = vmatprep.subr.bf16.mxu0 0
    %2021 = vmatpush1.bf16.msra.mxu0 0
    %2022 = vmatprep.subr.bf16.mxu0 0
    %2023 = vmatpush1.bf16.msra.mxu0 0
    %2024 = vmatprep.subr.bf16.mxu0 0
    %2025 = vmatpush1.bf16.msra.mxu0 0
    %2026 = vmatprep.subr.bf16.mxu0 0
    %2027 = vmatpush1.bf16.msra.mxu0 0
    %2028 = vmatprep.subr.bf16.mxu0 0
    %2029 = vmatpush1.bf16.msra.mxu0 0
    %2030 = vmatprep.subr.bf16.mxu0 0
    %2031 = vmatpush1.bf16.msra.mxu0 0
    %2032 = vmatprep.subr.bf16.mxu0 0
    %2033 = vmatpush1.bf16.msra.mxu0 0
    %2034 = vmatprep.subr.bf16.mxu0 0
    %2035 = vmatpush1.bf16.msra.mxu0 0
    %2036 = vmatprep.subr.bf16.mxu0 0
    %2037 = vmatpush1.bf16.msra.mxu0 0
    %2038 = vmatprep.subr.bf16.mxu0 0
    %2039 = vmatpush1.bf16.msra.mxu0 0
    %2040 = vmatprep.mubr.bf16.mxu0 0
    %2041 = vmatmul.mubr.bf16.gmra.mrb[0].mxu0 %v2006
    %v2042 = vpop.f32.mrb[0].mxu0
    %v2043 = vadd.f32 %v1979, %v2042
    %v2044 = vpop.f32.mrb[0].mxu0
    %v2045 = vpop.f32.mrb[0].mxu0
    %v2046 = vpop.f32.mrb[0].mxu0
    %2047 = vdwg.mxu0
    %vm2048 = vcmask 1041408
    %v2049 = vsel %vm2048, %v2043, -inf
    %2050 = vmax.xlane.f32.xlu0 %v2049
    %v2051 = vpop.xlane.xlu0 %2050
    %v2052 = vsub.f32 %v2043, %v2051
    %v2053 = vmul.f32 %v2052, 1.442695
    %v2054 = vpow.pop %v2053
    %v2055 = vsel %vm2048, %v2054, 0.0
    %2056 = vadd.xlane.f32.xlu0 %v2055
    %v2057 = vpop.xlane.xlu0 %2056
    %v2058 = vlog2.pop %v2057
    %v2059 = vmul.f32 %v2058, 0.6931472
    %v2060 = vsub.f32 %v2052, %v2059
    %2061 = vst [vmem:[#allocation7] sm:$0x3] %v2060
    %2063 = vrot.lane.b32.xlu0 %v1494, 64
    %v2064 = vpop.permute.xlu0 %2063
    %2066 = vrot.lane.b32.xlu0 %v1959, 96
    %v2067 = vpop.permute.xlu0 %2066
    %v2069 = vsel %vm1072, %v1028, %v2064
    %vm2070 = vcmask 785408
    %v2071 = vsel %vm2070, %v2069, %v2067
    %2072 = vst [vmem:[%s14] sm:$0x3] %v2071
    // Predicated region
    $region62: #{decoder_forward.1} parent=1 // pred_check
      _
    $region63: #{decoder_forward.1} parent=1 // pred_check_branch
      %2074 = sbr.rel (0) target = $region65
    $region64: #{decoder_forward.1} parent=1 // pred_region
      %s2076 = ssub.s32 32, 32
      %2077 = vsyncadd [#allocation4], %s2076
      %s2079 = sshll.u32 [#allocation7], 4
      %s2080 = int_to_ptr.vmem [resolvable:$true] %s2079
      %2082 = dma.vmem_to_hbm [thread:$0]  %s2080, 32, %s13, [#allocation4]
    $region65: #{decoder_forward.1} parent=1 // pred_fallthru
      _
    // Predicated region
    $region66: #{decoder_forward.1} parent=1 // pred_check
      _
    $region67: #{decoder_forward.1} parent=1 // pred_check_branch
      %2084 = sbr.rel (0) target = $region69
    $region68: #{decoder_forward.1} parent=1 // pred_region
      _
    $region69: #{decoder_forward.1} parent=1 // pred_fallthru
      _
    // Predicated region
    $region70: #{decoder_forward.1} parent=1 // pred_check
      _
    $region71: #{decoder_forward.1} parent=1 // pred_check_branch
      %2086 = sbr.rel (0) target = $region73
    $region72: #{decoder_forward.1} parent=1 // pred_region
      %2087 = dma.done [#allocation4], 32
    $region73: #{decoder_forward.1} parent=1 // pred_fallthru
      _
    // Predicated region
    $region74: #{decoder_forward.1} parent=1 // pred_check
      _
    $region75: #{decoder_forward.1} parent=1 // pred_check_branch
      %2089 = sbr.rel (0) target = $region77
    $region76: #{decoder_forward.1} parent=1 // pred_region
      _
    $region77: #{decoder_forward.1} parent=1 // pred_fallthru
      _
    %2090 = vsyncpa [#allocation3], 1
    %2091 = vsyncpa [#allocation6], 1
    %2092 = vsyncpa [#allocation4], 1

</llo_original>
